<compile_context>
chip_gen: v6e
topology: v6e:2x2x1
jax: 0.10.0
libtpu: 0.0.40
codegen_flags: <defaults>
</compile_context>

<pallas_src>
import jax
import jax.numpy as jnp
from jax import lax
from jax.experimental import pallas as pl
from jax.experimental.pallas import tpu as pltpu

NEG_SLOPE = 0.2          # GATConv default negative_slope
MASK_VALUE = -1e30

N_NODES = 16             # must be a power of two (diag mask uses a bitwise AND)
IN_CHANNELS = 8
OUT_CHANNELS = 4
HIDDEN = 8               # gat1 out_channels per head
HEADS1 = 8
HID1 = HEADS1 * HIDDEN   # 64
LANES1 = HEADS1 * N_NODES  # 128 (heads packed into lanes: lane index = hd*N + d)


def _softmax_alpha(src, dd, mask, n):
    """Masked attention softmax over sources; heads packed into lanes.

    src[s, hd*n+d] = a_src_h . h_s   (constant over d)
    dd [s, hd*n+d] = a_dst_h . h_s   (the s == d entry is the dst term of column d)
    Returns alpha[s, hd*n+d].
    """
    col = lax.broadcasted_iota(jnp.int32, src.shape, 1)
    row = lax.broadcasted_iota(jnp.int32, src.shape, 0)
    diag = jnp.bitwise_and(col, n - 1) == row              # (col % n) == row, n pow2
    dst = jnp.sum(jnp.where(diag, dd, 0.0), axis=0, keepdims=True)   # [1, H*n]
    e = src + dst                                          # e[src, hd*n+dst]
    e = jnp.where(e > 0, e, NEG_SLOPE * e)                 # LeakyReLU(0.2)
    e = jnp.where(mask, e, MASK_VALUE)
    e = e - jnp.max(e, axis=0, keepdims=True)              # softmax over sources
    p = jnp.where(mask, jnp.exp(e), 0.0)
    denom = jnp.maximum(jnp.sum(p, axis=0, keepdims=True), 1e-20)    # guard /0
    r = pl.reciprocal(denom, approx=True)                  # EUP slot (otherwise idle)
    r = r * (2.0 - denom * r)                              # one Newton step -> f32 exact
    return p * r


def _gat_fused_kernel(x_ref, adj_ref, p1_ref, p2_ref, out_ref):
    n = N_NODES
    x = x_ref[...]                                         # [N, IN]
    adj = adj_ref[...]                                     # [N, N]
    mask2 = adj > 0.0
    mask1 = jnp.concatenate([adj] * HEADS1, axis=1) > 0.0  # [N, H*N] head-tiled

    # ---------------- layer 1: GATConv(IN, 8, heads=8, concat=True) ----------------
    # slab1 rows 0:IN = [Wsrc1 | Wdst1 | W1 | pad] at lane offsets 0 / 128 / 256:
    # ONE MXU matmul yields src scores, dst scores and h for all 8 heads.
    y1 = jnp.dot(x, p1_ref[0:IN_CHANNELS, :], preferred_element_type=jnp.float32)
    src1 = y1[:, 0:LANES1]                                 # [N, 128]
    dd1 = y1[:, LANES1:2 * LANES1]                         # [N, 128]
    h1 = y1[:, 2 * LANES1:2 * LANES1 + HID1]               # [N, 64]
    alpha1 = _softmax_alpha(src1, dd1, mask1, n)           # [N, H*N]

    # Per-head aggregation; results stay in vregs (no scratch / narrow stores).
    outs = []
    for hd in range(HEADS1):                               # static, unrolled
        a_h = alpha1[:, hd * n:(hd + 1) * n]               # [N_src, N_dst]
        h_h = h1[:, hd * HIDDEN:(hd + 1) * HIDDEN]         # [N_src, F]
        outs.append(lax.dot_general(a_h, h_h, (((0,), (0,)), ((), ())),
                                    preferred_element_type=jnp.float32))   # [N_dst, F]
    agg1 = jnp.concatenate(outs, axis=1)                   # [N, 64]
    b1 = p1_ref[IN_CHANNELS:IN_CHANNELS + 1, 0:HID1]       # [1, 64]
    x2 = jnp.maximum(agg1 + b1, 0.0)                       # bias + ReLU
    # TODO(synk): F.dropout(p=0.6) and GATConv attention dropout are training-only;
    # identity in eval mode, so omitted.

    # ---------------- layer 2: GATConv(64, OUT, heads=1, concat=False) -------------
    # slab2 = [Wsrc2 | Wdst2 | W2 | pad]: one lane-dense matmul for all three.
    y2 = jnp.dot(x2, p2_ref[...], preferred_element_type=jnp.float32)      # [N, 128]
    src2 = y2[:, 0:n]
    dd2 = y2[:, n:2 * n]
    h2 = y2[:, 2 * n:2 * n + OUT_CHANNELS]                 # [N, OUT]
    alpha2 = _softmax_alpha(src2, dd2, mask2, n)           # [N, N]
    out = lax.dot_general(alpha2, h2, (((0,), (0,)), ((), ())),
                          preferred_element_type=jnp.float32)
    b2 = p1_ref[IN_CHANNELS:IN_CHANNELS + 1, HID1:HID1 + OUT_CHANNELS]     # [1, OUT]
    out_ref[...] = out + b2                                # mean over 1 head == identity


def _fold_att(w, att):
    """Fold the per-head attention vector through the weights: [in, H*F],[H,F]->[in,H]."""
    heads, fout = att.shape
    return jnp.einsum('ihf,hf->ih', w.reshape(w.shape[0], heads, fout), att)


def gat_forward(params, x, adj):
    """GAT.forward in eval mode: relu(gat1(x)) -> dropout(id) -> gat2 (one kernel)."""
    n = x.shape[0]
    assert n == N_NODES and (n & (n - 1)) == 0

    w1, b1 = params["w1"], params["b1"]
    w2, b2 = params["w2"], params["b2"]

    # Trace-time folding + lane packing (free; keeps the kernel lane-dense).
    src1 = jnp.repeat(_fold_att(w1, params["asrc1"]), n, axis=1)   # [IN, H*N] = [8,128]
    dst1 = jnp.repeat(_fold_att(w1, params["adst1"]), n, axis=1)   # [8, 128]
    src2 = jnp.repeat(_fold_att(w2, params["asrc2"]), n, axis=1)   # [64, 16]
    dst2 = jnp.repeat(_fold_att(w2, params["adst2"]), n, axis=1)   # [64, 16]

    # Parameter slab 1 [IN+1, 384]: rows 0:IN = [Wsrc1 | Wdst1 | W1 | pad] at
    # vreg-aligned lane offsets 0/128/256; row IN = [b1 (64) | b2 (4) | pad].
    slab1 = jnp.zeros((IN_CHANNELS + 1, 3 * LANES1), jnp.float32)
    slab1 = slab1.at[:IN_CHANNELS, 0:LANES1].set(src1)
    slab1 = slab1.at[:IN_CHANNELS, LANES1:2 * LANES1].set(dst1)
    slab1 = slab1.at[:IN_CHANNELS, 2 * LANES1:2 * LANES1 + HID1].set(w1)
    slab1 = slab1.at[IN_CHANNELS, 0:HID1].set(b1.reshape(-1))
    slab1 = slab1.at[IN_CHANNELS, HID1:HID1 + OUT_CHANNELS].set(b2.reshape(-1))

    # Parameter slab 2 [64, 128]: [Wsrc2 | Wdst2 | W2 | zero pad], one lane-dense block.
    slab2 = jnp.zeros((HID1, 128), jnp.float32)
    slab2 = slab2.at[:, 0:n].set(src2)
    slab2 = slab2.at[:, n:2 * n].set(dst2)
    slab2 = slab2.at[:, 2 * n:2 * n + OUT_CHANNELS].set(w2)

    vmem = pl.BlockSpec(memory_space=pltpu.MemorySpace.VMEM)
    return pl.pallas_call(
        _gat_fused_kernel,
        out_shape=jax.ShapeDtypeStruct((n, OUT_CHANNELS), jnp.float32),
        in_specs=[vmem] * 4,
        out_specs=vmem,
    )(x, adj, slab1, slab2)


# ---------------- pure-JAX reference (same dense math, no Pallas) ----------------
def _gat_conv_ref(x, adj, w, att_src, att_dst, bias, *, heads, fout, concat, apply_relu):
    n = x.shape[0]
    h = (x @ w).reshape(n, heads, fout)
    a_s = jnp.einsum('nhf,hf->nh', h, att_src)
    a_d = jnp.einsum('nhf,hf->nh', h, att_dst)
    e = a_s[:, None, :] + a_d[None, :, :]             # [src, dst, h]
    e = jnp.where(e > 0, e, NEG_SLOPE * e)
    mask = (adj > 0)[:, :, None]
    e = jnp.where(mask, e, MASK_VALUE)
    e = e - e.max(axis=0, keepdims=True)
    p = jnp.where(mask, jnp.exp(e), 0.0)
    alpha = p / p.sum(axis=0, keepdims=True)
    out = jnp.einsum('sdh,shf->dhf', alpha, h)
    out = out.reshape(n, heads * fout) if concat else out.mean(axis=1)
    out = out + bias.reshape(-1)
    return jnp.maximum(out, 0.0) if apply_relu else out


def _gat_forward_ref(params, x, adj):
    h = _gat_conv_ref(x, adj, params["w1"], params["asrc1"], params["adst1"],
                      params["b1"], heads=HEADS1, fout=HIDDEN, concat=True,
                      apply_relu=True)
    return _gat_conv_ref(h, adj, params["w2"], params["asrc2"], params["adst2"],
                         params["b2"], heads=1, fout=OUT_CHANNELS, concat=False,
                         apply_relu=False)


def init_params(key):
    ks = jax.random.split(key, 6)
    glorot = lambda k, shape: (jax.random.normal(k, shape, jnp.float32)
                               * jnp.sqrt(2.0 / (shape[0] + shape[-1])))
    return {
        # gat1: GATConv(IN_CHANNELS, 8, heads=8)
        "w1":    glorot(ks[0], (IN_CHANNELS, HEADS1 * HIDDEN)),
        "asrc1": glorot(ks[1], (HEADS1, HIDDEN)),
        "adst1": glorot(ks[2], (HEADS1, HIDDEN)),
        "b1":    jnp.zeros((1, HEADS1 * HIDDEN), jnp.float32),
        # gat2: GATConv(64, OUT_CHANNELS, heads=1, concat=False)
        "w2":    glorot(ks[3], (HEADS1 * HIDDEN, OUT_CHANNELS)),
        "asrc2": glorot(ks[4], (1, OUT_CHANNELS)),
        "adst2": glorot(ks[5], (1, OUT_CHANNELS)),
        "b2":    jnp.zeros((1, OUT_CHANNELS), jnp.float32),
    }


if __name__ == "__main__":
    key = jax.random.PRNGKey(0)
    k_x, k_p = jax.random.split(key)

    # Node features [N, in_channels]
    x = jax.random.normal(k_x, (N_NODES, IN_CHANNELS), jnp.float32)

    # Deterministic small graph: bidirectional ring -> edge_index [2, 2N]
    src = jnp.concatenate([jnp.arange(N_NODES), (jnp.arange(N_NODES) + 1) % N_NODES])
    dst = jnp.concatenate([(jnp.arange(N_NODES) + 1) % N_NODES, jnp.arange(N_NODES)])
    edge_index = jnp.stack([src, dst])                     # [2, 32]

    # Dense adjacency mask adj[src, dst], plus self-loops (add_self_loops=True).
    adj = jnp.zeros((N_NODES, N_NODES), jnp.float32)
    adj = adj.at[edge_index[0], edge_index[1]].set(1.0)
    adj = jnp.maximum(adj, jnp.eye(N_NODES, dtype=jnp.float32))

    params = init_params(k_p)

    out = gat_forward(params, x, adj)
    out = jax.block_until_ready(out)
    assert out.shape == (N_NODES, OUT_CHANNELS)

    ref = _gat_forward_ref(params, x, adj)
    assert jnp.allclose(out, ref, atol=1e-4, rtol=1e-4), "mismatch vs JAX reference"

    print("KERNEL_OK")
</pallas_src>

<mosaic_0001>
module attributes {stable_mosaic.version = 11 : i64} {
  func.func @_gat_fused_kernel(%arg0: memref<16x8xf32, #tpu.memory_space<vmem>>, %arg1: memref<16x16xf32, #tpu.memory_space<vmem>>, %arg2: memref<9x384xf32, #tpu.memory_space<vmem>>, %arg3: memref<64x128xf32, #tpu.memory_space<vmem>>, %arg4: memref<16x4xf32, #tpu.memory_space<vmem>>) attributes {dimension_semantics = [], scalar_prefetch = 0 : i64, scratch_operands = 0 : i64, tpu.core_type = #tpu.core_type<tc>} {
    %c0 = arith.constant 0 : index
    %c0_0 = arith.constant 0 : index
    %0 = vector.load %arg0[%c0, %c0_0] : memref<16x8xf32, #tpu.memory_space<vmem>>, vector<16x8xf32>
    %c0_1 = arith.constant 0 : index
    %c0_2 = arith.constant 0 : index
    %1 = vector.load %arg1[%c0_1, %c0_2] : memref<16x16xf32, #tpu.memory_space<vmem>>, vector<16x16xf32>
    %cst = arith.constant 0.000000e+00 : f32
    %2 = vector.broadcast %cst : f32 to vector<16x16xf32>
    %3 = arith.cmpf ogt, %1, %2 : vector<16x16xf32>
    %4 = tpu.concatenate %1, %1, %1, %1, %1, %1, %1, %1 in 1 : vector<16x16xf32>, vector<16x16xf32>, vector<16x16xf32>, vector<16x16xf32>, vector<16x16xf32>, vector<16x16xf32>, vector<16x16xf32>, vector<16x16xf32> -> vector<16x128xf32>
    %cst_3 = arith.constant 0.000000e+00 : f32
    %5 = vector.broadcast %cst_3 : f32 to vector<16x128xf32>
    %6 = arith.cmpf ogt, %4, %5 : vector<16x128xf32>
    %c0_4 = arith.constant 0 : index
    %c0_5 = arith.constant 0 : index
    %7 = vector.load %arg2[%c0_4, %c0_5] : memref<9x384xf32, #tpu.memory_space<vmem>>, vector<8x384xf32>
    %cst_6 = arith.constant dense<0.000000e+00> : vector<16x384xf32>
    %8 = tpu.matmul %0, %7, %cst_6 {dimension_numbers = #tpu.dot_dimension_numbers<[1], [0], [0], [1], [0, 0, 1, 1], [], []>} : vector<16x8xf32>, vector<8x384xf32>, vector<16x384xf32> -> vector<16x384xf32>
    %9 = vector.extract_strided_slice %8 {offsets = [0, 0], sizes = [16, 128], strides = [1, 1]} : vector<16x384xf32> to vector<16x128xf32>
    %10 = vector.extract_strided_slice %8 {offsets = [0, 128], sizes = [16, 128], strides = [1, 1]} : vector<16x384xf32> to vector<16x128xf32>
    %11 = vector.extract_strided_slice %8 {offsets = [0, 256], sizes = [16, 64], strides = [1, 1]} : vector<16x384xf32> to vector<16x64xf32>
    %12 = tpu.iota {dimensions = array<i32: 1>} : vector<16x128xi32>
    %13 = tpu.iota {dimensions = array<i32: 0>} : vector<16x128xi32>
    %c15_i32 = arith.constant 15 : i32
    %14 = vector.broadcast %c15_i32 : i32 to vector<16x128xi32>
    %15 = arith.andi %12, %14 : vector<16x128xi32>
    %16 = arith.cmpi eq, %15, %13 : vector<16x128xi32>
    %cst_7 = arith.constant 0.000000e+00 : f32
    %17 = vector.broadcast %cst_7 : f32 to vector<16x128xf32>
    %18 = arith.select %16, %10, %17 : vector<16x128xi1>, vector<16x128xf32>
    %cst_8 = arith.constant dense<0.000000e+00> : vector<128xf32>
    %19 = vector.multi_reduction <add>, %18, %cst_8 [0] : vector<16x128xf32> to vector<128xf32>
    %20 = vector.shape_cast %19 : vector<128xf32> to vector<1x128xf32>
    %21 = vector.broadcast %20 : vector<1x128xf32> to vector<16x128xf32>
    %22 = arith.addf %9, %21 : vector<16x128xf32>
    %cst_9 = arith.constant 0.000000e+00 : f32
    %23 = vector.broadcast %cst_9 : f32 to vector<16x128xf32>
    %24 = arith.cmpf ogt, %22, %23 : vector<16x128xf32>
    %cst_10 = arith.constant 2.000000e-01 : f32
    %25 = vector.broadcast %cst_10 : f32 to vector<16x128xf32>
    %26 = arith.mulf %25, %22 : vector<16x128xf32>
    %27 = arith.select %24, %22, %26 : vector<16x128xi1>, vector<16x128xf32>
    %cst_11 = arith.constant -1.000000e+30 : f32
    %28 = vector.broadcast %cst_11 : f32 to vector<16x128xf32>
    %29 = arith.select %6, %27, %28 : vector<16x128xi1>, vector<16x128xf32>
    %cst_12 = arith.constant dense<0xFF800000> : vector<128xf32>
    %30 = vector.multi_reduction <maximumf>, %29, %cst_12 [0] : vector<16x128xf32> to vector<128xf32>
    %31 = vector.shape_cast %30 : vector<128xf32> to vector<1x128xf32>
    %32 = vector.broadcast %31 : vector<1x128xf32> to vector<16x128xf32>
    %33 = arith.subf %29, %32 : vector<16x128xf32>
    %34 = math.exp %33 : vector<16x128xf32>
    %cst_13 = arith.constant 0.000000e+00 : f32
    %35 = vector.broadcast %cst_13 : f32 to vector<16x128xf32>
    %36 = arith.select %6, %34, %35 : vector<16x128xi1>, vector<16x128xf32>
    %cst_14 = arith.constant dense<0.000000e+00> : vector<128xf32>
    %37 = vector.multi_reduction <add>, %36, %cst_14 [0] : vector<16x128xf32> to vector<128xf32>
    %38 = vector.shape_cast %37 : vector<128xf32> to vector<1x128xf32>
    %cst_15 = arith.constant 9.99999968E-21 : f32
    %39 = vector.broadcast %cst_15 : f32 to vector<1x128xf32>
    %40 = arith.maximumf %38, %39 : vector<1x128xf32>
    %41 = tpu.reciprocal %40 {approx = true} : vector<1x128xf32> -> vector<1x128xf32>
    %42 = arith.mulf %40, %41 : vector<1x128xf32>
    %cst_16 = arith.constant 2.000000e+00 : f32
    %43 = vector.broadcast %cst_16 : f32 to vector<1x128xf32>
    %44 = arith.subf %43, %42 : vector<1x128xf32>
    %45 = arith.mulf %41, %44 : vector<1x128xf32>
    %46 = vector.broadcast %45 : vector<1x128xf32> to vector<16x128xf32>
    %47 = arith.mulf %36, %46 : vector<16x128xf32>
    %48 = vector.extract_strided_slice %47 {offsets = [0, 0], sizes = [16, 16], strides = [1, 1]} : vector<16x128xf32> to vector<16x16xf32>
    %49 = vector.extract_strided_slice %11 {offsets = [0, 0], sizes = [16, 8], strides = [1, 1]} : vector<16x64xf32> to vector<16x8xf32>
    %cst_17 = arith.constant dense<0.000000e+00> : vector<16x8xf32>
    %50 = tpu.matmul %48, %49, %cst_17 {dimension_numbers = #tpu.dot_dimension_numbers<[0], [0], [1], [1], [0, 1, 1, 1], [], []>} : vector<16x16xf32>, vector<16x8xf32>, vector<16x8xf32> -> vector<16x8xf32>
    %51 = vector.extract_strided_slice %47 {offsets = [0, 16], sizes = [16, 16], strides = [1, 1]} : vector<16x128xf32> to vector<16x16xf32>
    %52 = vector.extract_strided_slice %11 {offsets = [0, 8], sizes = [16, 8], strides = [1, 1]} : vector<16x64xf32> to vector<16x8xf32>
    %cst_18 = arith.constant dense<0.000000e+00> : vector<16x8xf32>
    %53 = tpu.matmul %51, %52, %cst_18 {dimension_numbers = #tpu.dot_dimension_numbers<[0], [0], [1], [1], [0, 1, 1, 1], [], []>} : vector<16x16xf32>, vector<16x8xf32>, vector<16x8xf32> -> vector<16x8xf32>
    %54 = vector.extract_strided_slice %47 {offsets = [0, 32], sizes = [16, 16], strides = [1, 1]} : vector<16x128xf32> to vector<16x16xf32>
    %55 = vector.extract_strided_slice %11 {offsets = [0, 16], sizes = [16, 8], strides = [1, 1]} : vector<16x64xf32> to vector<16x8xf32>
    %cst_19 = arith.constant dense<0.000000e+00> : vector<16x8xf32>
    %56 = tpu.matmul %54, %55, %cst_19 {dimension_numbers = #tpu.dot_dimension_numbers<[0], [0], [1], [1], [0, 1, 1, 1], [], []>} : vector<16x16xf32>, vector<16x8xf32>, vector<16x8xf32> -> vector<16x8xf32>
    %57 = vector.extract_strided_slice %47 {offsets = [0, 48], sizes = [16, 16], strides = [1, 1]} : vector<16x128xf32> to vector<16x16xf32>
    %58 = vector.extract_strided_slice %11 {offsets = [0, 24], sizes = [16, 8], strides = [1, 1]} : vector<16x64xf32> to vector<16x8xf32>
    %cst_20 = arith.constant dense<0.000000e+00> : vector<16x8xf32>
    %59 = tpu.matmul %57, %58, %cst_20 {dimension_numbers = #tpu.dot_dimension_numbers<[0], [0], [1], [1], [0, 1, 1, 1], [], []>} : vector<16x16xf32>, vector<16x8xf32>, vector<16x8xf32> -> vector<16x8xf32>
    %60 = vector.extract_strided_slice %47 {offsets = [0, 64], sizes = [16, 16], strides = [1, 1]} : vector<16x128xf32> to vector<16x16xf32>
    %61 = vector.extract_strided_slice %11 {offsets = [0, 32], sizes = [16, 8], strides = [1, 1]} : vector<16x64xf32> to vector<16x8xf32>
    %cst_21 = arith.constant dense<0.000000e+00> : vector<16x8xf32>
    %62 = tpu.matmul %60, %61, %cst_21 {dimension_numbers = #tpu.dot_dimension_numbers<[0], [0], [1], [1], [0, 1, 1, 1], [], []>} : vector<16x16xf32>, vector<16x8xf32>, vector<16x8xf32> -> vector<16x8xf32>
    %63 = vector.extract_strided_slice %47 {offsets = [0, 80], sizes = [16, 16], strides = [1, 1]} : vector<16x128xf32> to vector<16x16xf32>
    %64 = vector.extract_strided_slice %11 {offsets = [0, 40], sizes = [16, 8], strides = [1, 1]} : vector<16x64xf32> to vector<16x8xf32>
    %cst_22 = arith.constant dense<0.000000e+00> : vector<16x8xf32>
    %65 = tpu.matmul %63, %64, %cst_22 {dimension_numbers = #tpu.dot_dimension_numbers<[0], [0], [1], [1], [0, 1, 1, 1], [], []>} : vector<16x16xf32>, vector<16x8xf32>, vector<16x8xf32> -> vector<16x8xf32>
    %66 = vector.extract_strided_slice %47 {offsets = [0, 96], sizes = [16, 16], strides = [1, 1]} : vector<16x128xf32> to vector<16x16xf32>
    %67 = vector.extract_strided_slice %11 {offsets = [0, 48], sizes = [16, 8], strides = [1, 1]} : vector<16x64xf32> to vector<16x8xf32>
    %cst_23 = arith.constant dense<0.000000e+00> : vector<16x8xf32>
    %68 = tpu.matmul %66, %67, %cst_23 {dimension_numbers = #tpu.dot_dimension_numbers<[0], [0], [1], [1], [0, 1, 1, 1], [], []>} : vector<16x16xf32>, vector<16x8xf32>, vector<16x8xf32> -> vector<16x8xf32>
    %69 = vector.extract_strided_slice %47 {offsets = [0, 112], sizes = [16, 16], strides = [1, 1]} : vector<16x128xf32> to vector<16x16xf32>
    %70 = vector.extract_strided_slice %11 {offsets = [0, 56], sizes = [16, 8], strides = [1, 1]} : vector<16x64xf32> to vector<16x8xf32>
    %cst_24 = arith.constant dense<0.000000e+00> : vector<16x8xf32>
    %71 = tpu.matmul %69, %70, %cst_24 {dimension_numbers = #tpu.dot_dimension_numbers<[0], [0], [1], [1], [0, 1, 1, 1], [], []>} : vector<16x16xf32>, vector<16x8xf32>, vector<16x8xf32> -> vector<16x8xf32>
    %72 = tpu.concatenate %50, %53, %56, %59, %62, %65, %68, %71 in 1 : vector<16x8xf32>, vector<16x8xf32>, vector<16x8xf32>, vector<16x8xf32>, vector<16x8xf32>, vector<16x8xf32>, vector<16x8xf32>, vector<16x8xf32> -> vector<16x64xf32>
    %c8 = arith.constant 8 : index
    %c0_25 = arith.constant 0 : index
    %73 = vector.load %arg2[%c8, %c0_25] : memref<9x384xf32, #tpu.memory_space<vmem>>, vector<1x64xf32>
    %74 = vector.broadcast %73 : vector<1x64xf32> to vector<16x64xf32>
    %75 = arith.addf %72, %74 : vector<16x64xf32>
    %cst_26 = arith.constant 0.000000e+00 : f32
    %76 = vector.broadcast %cst_26 : f32 to vector<16x64xf32>
    %77 = arith.maximumf %75, %76 : vector<16x64xf32>
    %c0_27 = arith.constant 0 : index
    %c0_28 = arith.constant 0 : index
    %78 = vector.load %arg3[%c0_27, %c0_28] : memref<64x128xf32, #tpu.memory_space<vmem>>, vector<64x128xf32>
    %cst_29 = arith.constant dense<0.000000e+00> : vector<16x128xf32>
    %79 = tpu.matmul %77, %78, %cst_29 {dimension_numbers = #tpu.dot_dimension_numbers<[1], [0], [0], [1], [0, 0, 1, 1], [], []>} : vector<16x64xf32>, vector<64x128xf32>, vector<16x128xf32> -> vector<16x128xf32>
    %80 = vector.extract_strided_slice %79 {offsets = [0, 0], sizes = [16, 16], strides = [1, 1]} : vector<16x128xf32> to vector<16x16xf32>
    %81 = vector.extract_strided_slice %79 {offsets = [0, 16], sizes = [16, 16], strides = [1, 1]} : vector<16x128xf32> to vector<16x16xf32>
    %82 = vector.extract_strided_slice %79 {offsets = [0, 32], sizes = [16, 4], strides = [1, 1]} : vector<16x128xf32> to vector<16x4xf32>
    %83 = tpu.iota {dimensions = array<i32: 1>} : vector<16x16xi32>
    %84 = tpu.iota {dimensions = array<i32: 0>} : vector<16x16xi32>
    %c15_i32_30 = arith.constant 15 : i32
    %85 = vector.broadcast %c15_i32_30 : i32 to vector<16x16xi32>
    %86 = arith.andi %83, %85 : vector<16x16xi32>
    %87 = arith.cmpi eq, %86, %84 : vector<16x16xi32>
    %cst_31 = arith.constant 0.000000e+00 : f32
    %88 = vector.broadcast %cst_31 : f32 to vector<16x16xf32>
    %89 = arith.select %87, %81, %88 : vector<16x16xi1>, vector<16x16xf32>
    %cst_32 = arith.constant dense<0.000000e+00> : vector<16xf32>
    %90 = vector.multi_reduction <add>, %89, %cst_32 [0] : vector<16x16xf32> to vector<16xf32>
    %91 = vector.shape_cast %90 : vector<16xf32> to vector<1x16xf32>
    %92 = vector.broadcast %91 : vector<1x16xf32> to vector<16x16xf32>
    %93 = arith.addf %80, %92 : vector<16x16xf32>
    %cst_33 = arith.constant 0.000000e+00 : f32
    %94 = vector.broadcast %cst_33 : f32 to vector<16x16xf32>
    %95 = arith.cmpf ogt, %93, %94 : vector<16x16xf32>
    %cst_34 = arith.constant 2.000000e-01 : f32
    %96 = vector.broadcast %cst_34 : f32 to vector<16x16xf32>
    %97 = arith.mulf %96, %93 : vector<16x16xf32>
    %98 = arith.select %95, %93, %97 : vector<16x16xi1>, vector<16x16xf32>
    %cst_35 = arith.constant -1.000000e+30 : f32
    %99 = vector.broadcast %cst_35 : f32 to vector<16x16xf32>
    %100 = arith.select %3, %98, %99 : vector<16x16xi1>, vector<16x16xf32>
    %cst_36 = arith.constant dense<0xFF800000> : vector<16xf32>
    %101 = vector.multi_reduction <maximumf>, %100, %cst_36 [0] : vector<16x16xf32> to vector<16xf32>
    %102 = vector.shape_cast %101 : vector<16xf32> to vector<1x16xf32>
    %103 = vector.broadcast %102 : vector<1x16xf32> to vector<16x16xf32>
    %104 = arith.subf %100, %103 : vector<16x16xf32>
    %105 = math.exp %104 : vector<16x16xf32>
    %cst_37 = arith.constant 0.000000e+00 : f32
    %106 = vector.broadcast %cst_37 : f32 to vector<16x16xf32>
    %107 = arith.select %3, %105, %106 : vector<16x16xi1>, vector<16x16xf32>
    %cst_38 = arith.constant dense<0.000000e+00> : vector<16xf32>
    %108 = vector.multi_reduction <add>, %107, %cst_38 [0] : vector<16x16xf32> to vector<16xf32>
    %109 = vector.shape_cast %108 : vector<16xf32> to vector<1x16xf32>
    %cst_39 = arith.constant 9.99999968E-21 : f32
    %110 = vector.broadcast %cst_39 : f32 to vector<1x16xf32>
    %111 = arith.maximumf %109, %110 : vector<1x16xf32>
    %112 = tpu.reciprocal %111 {approx = true} : vector<1x16xf32> -> vector<1x16xf32>
    %113 = arith.mulf %111, %112 : vector<1x16xf32>
    %cst_40 = arith.constant 2.000000e+00 : f32
    %114 = vector.broadcast %cst_40 : f32 to vector<1x16xf32>
    %115 = arith.subf %114, %113 : vector<1x16xf32>
    %116 = arith.mulf %112, %115 : vector<1x16xf32>
    %117 = vector.broadcast %116 : vector<1x16xf32> to vector<16x16xf32>
    %118 = arith.mulf %107, %117 : vector<16x16xf32>
    %cst_41 = arith.constant dense<0.000000e+00> : vector<16x4xf32>
    %119 = tpu.matmul %118, %82, %cst_41 {dimension_numbers = #tpu.dot_dimension_numbers<[0], [0], [1], [1], [0, 1, 1, 1], [], []>} : vector<16x16xf32>, vector<16x4xf32>, vector<16x4xf32> -> vector<16x4xf32>
    %c8_42 = arith.constant 8 : index
    %c64 = arith.constant 64 : index
    %120 = vector.load %arg2[%c8_42, %c64] : memref<9x384xf32, #tpu.memory_space<vmem>>, vector<1x4xf32>
    %121 = vector.broadcast %120 : vector<1x4xf32> to vector<16x4xf32>
    %122 = arith.addf %119, %121 : vector<16x4xf32>
    %c0_43 = arith.constant 0 : index
    %c0_44 = arith.constant 0 : index
    %123 = vector.load %arg4[%c0_43, %c0_44] : memref<16x4xf32, #tpu.memory_space<vmem>>, vector<16x4xf32>
    tpu.vector_store %arg4[%c0_43, %c0_44], %122 {strides = array<i32>} : memref<16x4xf32, #tpu.memory_space<vmem>>, vector<16x4xf32>,
    return
  }
}

</mosaic_0001>

<llo_original>
// kernel: tpu_custom_call.1
$region0: #{tpu_custom_call.1}
  #allocation0 [shape = 'u32[]', space=smem, size = 0x4, offset = 0x4, fixed_abs, tag = 'smem constant byte address 0x4 - core index']
  #allocation1 [shape = 'u32[144,128]{1,0:T(1,128)}', space=vmem, size = 0x12000, scoped, tag = 'internal scratch']
  %s0 = inlined_call_operand.vmem [shape: f32[16,8], index: 0, kind: input, shape index: {}]
  %s1 = inlined_call_operand.vmem [shape: f32[16,16], index: 1, kind: input, shape index: {}]
  %s2 = inlined_call_operand.hbm [shape: f32[9,384], index: 2, kind: input, shape index: {}]
  %s3 = inlined_call_operand.hbm [shape: f32[64,128], index: 3, kind: input, shape index: {}]
  %s4 = inlined_call_operand.vmem [shape: f32[16,4], index: 4, kind: output, shape index: {}]
  %s5 = sld [smem:[#allocation0]]
  $region34: #{tpu_custom_call.1} parent=0
    _
  %s7 = ssub.s32 1, %s5
  %s8 = scalar_select 0, %s7, %s5
  $region1: #{tpu_custom_call.1} parent=0
    #allocation2 [shape = 'u8[24576]{0}', space=vmem, size = 0x6000, scoped, tag = 'input window, operand 2, single buffered']
    #allocation3 [shape = 's32[1]{0}', space=sflag, size = 0x4, scoped, tag = 'scoped memory for tpu_custom_call.1']
    #allocation4 [shape = 'u8[32768]{0}', space=vmem, size = 0x8000, scoped, tag = 'input window, operand 3, single buffered']
    #allocation5 [shape = 's32[1]{0}', space=sflag, size = 0x4, scoped, tag = 'scoped memory for tpu_custom_call.1']
    %9 = vsyncpa [#allocation3], 0
    %10 = vsyncpa [#allocation5], 0
    // Predicated region
    $region2: #{tpu_custom_call.1} parent=1 // pred_check
      _
    $region3: #{tpu_custom_call.1} parent=1 // pred_check_branch
      %12 = sbr.rel (0) target = $region5
    $region4: #{tpu_custom_call.1} parent=1 // pred_region
      _
    $region5: #{tpu_custom_call.1} parent=1 // pred_fallthru
      _
    // Predicated region
    $region6: #{tpu_custom_call.1} parent=1 // pred_check
      _
    $region7: #{tpu_custom_call.1} parent=1 // pred_check_branch
      %14 = sbr.rel (0) target = $region9
    $region8: #{tpu_custom_call.1} parent=1 // pred_region
      _
    $region9: #{tpu_custom_call.1} parent=1 // pred_fallthru
      _
    // Predicated region
    $region10: #{tpu_custom_call.1} parent=1 // pred_check
      _
    $region11: #{tpu_custom_call.1} parent=1 // pred_check_branch
      %16 = sbr.rel (0) target = $region13
    $region12: #{tpu_custom_call.1} parent=1 // pred_region
      %s18 = ssub.s32 768, 768
      %19 = vsyncadd [#allocation3], %s18
      %s20 = sshll.u32 [#allocation2], 4
      %s21 = int_to_ptr.vmem [resolvable:$true] %s20
      %26 = dma.hbm_to_vmem [thread:$0]  %s2, 768, %s21, [#allocation3], 384, 384, 24
    $region13: #{tpu_custom_call.1} parent=1 // pred_fallthru
      _
    // Predicated region
    $region14: #{tpu_custom_call.1} parent=1 // pred_check
      _
    $region15: #{tpu_custom_call.1} parent=1 // pred_check_branch
      %28 = sbr.rel (0) target = $region17
    $region16: #{tpu_custom_call.1} parent=1 // pred_region
      %s30 = ssub.s32 1024, 1024
      %31 = vsyncadd [#allocation5], %s30
      %s32 = sshll.u32 [#allocation4], 4
      %s33 = int_to_ptr.vmem [resolvable:$true] %s32
      %38 = dma.hbm_to_vmem [thread:$0]  %s3, 1024, %s33, [#allocation5], 128, 128, 8
    $region17: #{tpu_custom_call.1} parent=1 // pred_fallthru
      _
    // Predicated region
    $region18: #{tpu_custom_call.1} parent=1 // pred_check
      _
    $region19: #{tpu_custom_call.1} parent=1 // pred_check_branch
      %40 = sbr.rel (0) target = $region21
    $region20: #{tpu_custom_call.1} parent=1 // pred_region
      %41 = dma.done [#allocation3], 768
    $region21: #{tpu_custom_call.1} parent=1 // pred_fallthru
      _
    // Predicated region
    $region22: #{tpu_custom_call.1} parent=1 // pred_check
      _
    $region23: #{tpu_custom_call.1} parent=1 // pred_check_branch
      %43 = sbr.rel (0) target = $region25
    $region24: #{tpu_custom_call.1} parent=1 // pred_region
      %44 = dma.done [#allocation5], 1024
    $region25: #{tpu_custom_call.1} parent=1 // pred_fallthru
      _
    %v45 = vld [vmem:[%s0] sm:$0xff]
    %v46 = vld [vmem:[%s0 + $0x8] sm:$0xff]
    %v47 = vld [vmem:[%s1] sm:$0xff]
    %v48 = vld [vmem:[%s1 + $0x8] sm:$0xff]
    %vm49 = vcmp.gt.f32.partialorder %v47, 0.0
    %vm50 = vcmp.gt.f32.partialorder %v48, 0.0
    %53 = vrot.lane.b32.xlu0 %v47, 16
    %v54 = vpop.permute.xlu0 %53
    %55 = vrot.lane.b32.xlu0 %v48, 16
    %v56 = vpop.permute.xlu0 %55
    %59 = vrot.lane.b32.xlu0 %v47, 32
    %v60 = vpop.permute.xlu0 %59
    %61 = vrot.lane.b32.xlu0 %v48, 32
    %v62 = vpop.permute.xlu0 %61
    %65 = vrot.lane.b32.xlu0 %v47, 48
    %v66 = vpop.permute.xlu0 %65
    %67 = vrot.lane.b32.xlu0 %v48, 48
    %v68 = vpop.permute.xlu0 %67
    %71 = vrot.lane.b32.xlu0 %v47, 64
    %v72 = vpop.permute.xlu0 %71
    %73 = vrot.lane.b32.xlu0 %v48, 64
    %v74 = vpop.permute.xlu0 %73
    %77 = vrot.lane.b32.xlu0 %v47, 80
    %v78 = vpop.permute.xlu0 %77
    %79 = vrot.lane.b32.xlu0 %v48, 80
    %v80 = vpop.permute.xlu0 %79
    %83 = vrot.lane.b32.xlu0 %v47, 96
    %v84 = vpop.permute.xlu0 %83
    %85 = vrot.lane.b32.xlu0 %v48, 96
    %v86 = vpop.permute.xlu0 %85
    %89 = vrot.lane.b32.xlu0 %v47, 112
    %v90 = vpop.permute.xlu0 %89
    %91 = vrot.lane.b32.xlu0 %v48, 112
    %v92 = vpop.permute.xlu0 %91
    %vm95 = vcmask 130048
    %v96 = vsel %vm95, %v47, %v54
    %v97 = vsel %vm95, %v48, %v56
    %vm98 = vcmask 261120
    %v99 = vsel %vm98, %v96, %v60
    %v100 = vsel %vm98, %v97, %v62
    %vm101 = vcmask 392192
    %v102 = vsel %vm101, %v99, %v66
    %v103 = vsel %vm101, %v100, %v68
    %vm104 = vcmask 523264
    %v105 = vsel %vm104, %v102, %v72
    %v106 = vsel %vm104, %v103, %v74
    %vm107 = vcmask 654336
    %v108 = vsel %vm107, %v105, %v78
    %v109 = vsel %vm107, %v106, %v80
    %vm110 = vcmask 785408
    %v111 = vsel %vm110, %v108, %v84
    %v112 = vsel %vm110, %v109, %v86
    %vm113 = vcmask 916480
    %v114 = vsel %vm113, %v111, %v90
    %v115 = vsel %vm113, %v112, %v92
    %vm116 = vcmp.gt.f32.partialorder %v114, 0.0
    %vm117 = vcmp.gt.f32.partialorder %v115, 0.0
    %v118 = vld [vmem:[#allocation2] sm:$0xff]
    %v119 = vld [vmem:[#allocation2 + $0x8] sm:$0xff]
    %v120 = vld [vmem:[#allocation2 + $0x10] sm:$0xff]
    %vm121 = vcmask 64512
    %v123 = vsel %vm121, %v45, 0
    %v126 = vsel %vm121, %v46, 0
    %128 = vmatprep.subr.mxu0 0.0
    %129 = vmatpush1.msra.mxu0 0.0
    %130 = vmatprep.subr.mxu0 0.0
    %131 = vmatpush1.msra.mxu0 0.0
    %132 = vmatprep.subr.mxu0 0.0
    %133 = vmatpush1.msra.mxu0 0.0
    %134 = vmatprep.subr.mxu0 0.0
    %135 = vmatpush1.msra.mxu0 0.0
    %136 = vmatprep.subr.mxu0 0.0
    %137 = vmatpush1.msra.mxu0 0.0
    %138 = vmatprep.subr.mxu0 0.0
    %139 = vmatpush1.msra.mxu0 0.0
    %140 = vmatprep.subr.mxu0 0.0
    %141 = vmatpush1.msra.mxu0 0.0
    %142 = vmatprep.subr.mxu0 0.0
    %143 = vmatpush1.msra.mxu0 0.0
    %144 = vmatprep.subr.mxu0 0.0
    %145 = vmatpush1.msra.mxu0 0.0
    %146 = vmatprep.subr.mxu0 0.0
    %147 = vmatpush1.msra.mxu0 0.0
    %148 = vmatprep.subr.mxu0 0.0
    %149 = vmatpush1.msra.mxu0 0.0
    %150 = vmatprep.subr.mxu0 0.0
    %151 = vmatpush1.msra.mxu0 0.0
    %152 = vmatprep.subr.mxu0 0.0
    %153 = vmatpush1.msra.mxu0 0.0
    %154 = vmatprep.subr.mxu0 0.0
    %155 = vmatpush1.msra.mxu0 0.0
    %156 = vmatprep.subr.mxu0 0.0
    %157 = vmatpush1.msra.mxu0 0.0
    %158 = vmatprep.subr.mxu0 %v119
    %159 = vmatpush1.msra.mxu0 %v118
    %160 = vmatprep.subr.mxu0 0.0
    %161 = vmatpush2.msra.mxu0 0.0
    %162 = vmatprep.subr.mxu0 0.0
    %163 = vmatpush2.msra.mxu0 0.0
    %164 = vmatprep.subr.mxu0 0.0
    %165 = vmatpush2.msra.mxu0 0.0
    %166 = vmatprep.subr.mxu0 0.0
    %167 = vmatpush2.msra.mxu0 0.0
    %168 = vmatprep.subr.mxu0 0.0
    %169 = vmatpush2.msra.mxu0 0.0
    %170 = vmatprep.subr.mxu0 0.0
    %171 = vmatpush2.msra.mxu0 0.0
    %172 = vmatprep.subr.mxu0 0.0
    %173 = vmatpush2.msra.mxu0 0.0
    %174 = vmatprep.subr.mxu0 0.0
    %175 = vmatpush2.msra.mxu0 0.0
    %176 = vmatprep.subr.mxu0 0.0
    %177 = vmatpush2.msra.mxu0 0.0
    %178 = vmatprep.subr.mxu0 0.0
    %179 = vmatpush2.msra.mxu0 0.0
    %180 = vmatprep.subr.mxu0 0.0
    %181 = vmatpush2.msra.mxu0 0.0
    %182 = vmatprep.subr.mxu0 0.0
    %183 = vmatpush2.msra.mxu0 0.0
    %184 = vmatprep.subr.mxu0 0.0
    %185 = vmatpush2.msra.mxu0 0.0
    %186 = vmatprep.subr.mxu0 0.0
    %187 = vmatpush2.msra.mxu0 0.0
    %188 = vmatprep.subr.mxu0 0.0
    %189 = vmatpush2.msra.mxu0 0.0
    %190 = vmatprep.subr.mxu0 0.0
    %191 = vmatpush2.msra.mxu0 0.0
    %192 = vmatprep.mubr.f32.mxu0 0.0
    %193 = vmatmul.mubr.f32.gmra.mxu0 %v123
    %v194 = vpop.f32.mrf.mxu0
    %v195 = vadd.f32 0.0, %v194
    %v196 = vpop.f32.mrf.mxu0
    %v197 = vadd.f32 0.0, %v196
    %198 = vmatprep.mubr.f32.mxu0 0.0
    %199 = vmatmul.mubr.f32.gmra.mxu0 %v126
    %v200 = vpop.f32.mrf.mxu0
    %v201 = vadd.f32 0.0, %v200
    %v202 = vpop.f32.mrf.mxu0
    %v203 = vadd.f32 0.0, %v202
    %204 = vdwg.mxu0
    %205 = vmatprep.subr.mxu0 0.0
    %206 = vmatpush1.msra.mxu0 0.0
    %207 = vmatprep.subr.mxu0 0.0
    %208 = vmatpush1.msra.mxu0 0.0
    %209 = vmatprep.subr.mxu0 0.0
    %210 = vmatpush1.msra.mxu0 0.0
    %211 = vmatprep.subr.mxu0 0.0
    %212 = vmatpush1.msra.mxu0 0.0
    %213 = vmatprep.subr.mxu0 0.0
    %214 = vmatpush1.msra.mxu0 0.0
    %215 = vmatprep.subr.mxu0 0.0
    %216 = vmatpush1.msra.mxu0 0.0
    %217 = vmatprep.subr.mxu0 0.0
    %218 = vmatpush1.msra.mxu0 0.0
    %219 = vmatprep.subr.mxu0 0.0
    %220 = vmatpush1.msra.mxu0 0.0
    %221 = vmatprep.subr.mxu0 0.0
    %222 = vmatpush1.msra.mxu0 0.0
    %223 = vmatprep.subr.mxu0 0.0
    %224 = vmatpush1.msra.mxu0 0.0
    %225 = vmatprep.subr.mxu0 0.0
    %226 = vmatpush1.msra.mxu0 0.0
    %227 = vmatprep.subr.mxu0 0.0
    %228 = vmatpush1.msra.mxu0 0.0
    %229 = vmatprep.subr.mxu0 0.0
    %230 = vmatpush1.msra.mxu0 0.0
    %231 = vmatprep.subr.mxu0 0.0
    %232 = vmatpush1.msra.mxu0 0.0
    %233 = vmatprep.subr.mxu0 0.0
    %234 = vmatpush1.msra.mxu0 0.0
    %235 = vmatprep.subr.mxu0 0.0
    %236 = vmatpush1.msra.mxu0 %v120
    %237 = vmatprep.subr.mxu0 0.0
    %238 = vmatpush2.msra.mxu0 0.0
    %239 = vmatprep.subr.mxu0 0.0
    %240 = vmatpush2.msra.mxu0 0.0
    %241 = vmatprep.subr.mxu0 0.0
    %242 = vmatpush2.msra.mxu0 0.0
    %243 = vmatprep.subr.mxu0 0.0
    %244 = vmatpush2.msra.mxu0 0.0
    %245 = vmatprep.subr.mxu0 0.0
    %246 = vmatpush2.msra.mxu0 0.0
    %247 = vmatprep.subr.mxu0 0.0
    %248 = vmatpush2.msra.mxu0 0.0
    %249 = vmatprep.subr.mxu0 0.0
    %250 = vmatpush2.msra.mxu0 0.0
    %251 = vmatprep.subr.mxu0 0.0
    %252 = vmatpush2.msra.mxu0 0.0
    %253 = vmatprep.subr.mxu0 0.0
    %254 = vmatpush2.msra.mxu0 0.0
    %255 = vmatprep.subr.mxu0 0.0
    %256 = vmatpush2.msra.mxu0 0.0
    %257 = vmatprep.subr.mxu0 0.0
    %258 = vmatpush2.msra.mxu0 0.0
    %259 = vmatprep.subr.mxu0 0.0
    %260 = vmatpush2.msra.mxu0 0.0
    %261 = vmatprep.subr.mxu0 0.0
    %262 = vmatpush2.msra.mxu0 0.0
    %263 = vmatprep.subr.mxu0 0.0
    %264 = vmatpush2.msra.mxu0 0.0
    %265 = vmatprep.subr.mxu0 0.0
    %266 = vmatpush2.msra.mxu0 0.0
    %267 = vmatprep.subr.mxu0 0.0
    %268 = vmatpush2.msra.mxu0 0.0
    %269 = vmatprep.mubr.f32.mxu0 0.0
    %270 = vmatmul.mubr.f32.gmra.mxu0 %v123
    %v271 = vpop.f32.mrf.mxu0
    %v272 = vadd.f32 0.0, %v271
    %v273 = vpop.f32.mrf.mxu0
    %274 = vmatprep.mubr.f32.mxu0 0.0
    %275 = vmatmul.mubr.f32.gmra.mxu0 %v126
    %v276 = vpop.f32.mrf.mxu0
    %v277 = vadd.f32 0.0, %v276
    %v278 = vpop.f32.mrf.mxu0
    %279 = vdwg.mxu0
    %v280 = vlaneseq
    %v281 = vand.u32 %v280, 127
    %v282 = vlaneseq
    %v283 = vshrl.u32 %v282, 7
    %v284 = vadd.s32 %v283, 8
    %v285 = vand.u32 %v281, 15
    %vm286 = vcmp.eq.s32.totalorder %v285, %v283
    %vm287 = vcmp.eq.s32.totalorder %v285, %v284
    %v288 = vsel %vm286, %v197, 0.0
    %v289 = vsel %vm287, %v203, 0.0
    %v290 = vadd.f32 %v288, %v289
    %v291 = vrot.slane %v290, 4
    %v292 = vadd.f32 %v290, %v291
    %v293 = vrot.slane %v292, 2
    %v294 = vadd.f32 %v292, %v293
    %v295 = vrot.slane %v294, 1
    %v296 = vadd.f32 %v294, %v295
    %v297 = vadd.f32 %v195, %v296
    %v298 = vadd.f32 %v201, %v296
    %vm299 = vcmp.gt.f32.partialorder %v297, 0.0
    %vm300 = vcmp.gt.f32.partialorder %v298, 0.0
    %v301 = vmul.f32 %v297, 0.2
    %v302 = vmul.f32 %v298, 0.2
    %v303 = vsel %vm299, %v297, %v301
    %v304 = vsel %vm300, %v298, %v302
    %v305 = vsel %vm116, %v303, -1e+30
    %v306 = vsel %vm117, %v304, -1e+30
    %v307 = vmax.f32 %v305, %v306
    %v308 = vrot.slane %v307, 4
    %v309 = vmax.f32 %v307, %v308
    %v310 = vrot.slane %v309, 2
    %v311 = vmax.f32 %v309, %v310
    %v312 = vrot.slane %v311, 1
    %v313 = vmax.f32 %v311, %v312
    %v314 = vsub.f32 %v305, %v313
    %v315 = vsub.f32 %v306, %v313
    %v316 = vmul.f32 %v314, 1.442695
    %v317 = vpow.pop %v316
    %v318 = vmul.f32 %v315, 1.442695
    %v319 = vpow.pop %v318
    %v320 = vsel %vm116, %v317, 0.0
    %v321 = vsel %vm117, %v319, 0.0
    %v322 = vadd.f32 %v320, %v321
    %v323 = vrot.slane %v322, 4
    %v324 = vadd.f32 %v322, %v323
    %v325 = vrot.slane %v324, 2
    %v326 = vadd.f32 %v324, %v325
    %v327 = vrot.slane %v326, 1
    %v328 = vadd.f32 %v326, %v327
    %v329 = vmax.f32 %v328, 1e-20
    %v330 = vrcp.pop %v329
    %v331 = vmul.f32 %v329, %v330
    %v332 = vsub.f32 2.0, %v331
    %v333 = vmul.f32 %v330, %v332
    %v334 = vmul.f32 %v320, %v333
    %v335 = vmul.f32 %v321, %v333
    %336 = vxpose.xlu0.b32.start [1/16] %v334, 128
    %337 = vxpose.xlu0.b32.cont [2/16] %v335, 128
    %338 = vxpose.xlu0.b32.cont [3/16] 0.0, 128
    %339 = vxpose.xlu0.b32.cont [4/16] 0.0, 128
    %340 = vxpose.xlu0.b32.cont [5/16] 0.0, 128
    %341 = vxpose.xlu0.b32.cont [6/16] 0.0, 128
    %342 = vxpose.xlu0.b32.cont [7/16] 0.0, 128
    %343 = vxpose.xlu0.b32.cont [8/16] 0.0, 128
    %344 = vxpose.xlu0.b32.cont [9/16] 0.0, 128
    %345 = vxpose.xlu0.b32.cont [10/16] 0.0, 128
    %346 = vxpose.xlu0.b32.cont [11/16] 0.0, 128
    %347 = vxpose.xlu0.b32.cont [12/16] 0.0, 128
    %348 = vxpose.xlu0.b32.cont [13/16] 0.0, 128
    %349 = vxpose.xlu0.b32.cont [14/16] 0.0, 128
    %350 = vxpose.xlu0.b32.cont [15/16] 0.0, 128
    %351 = vxpose.xlu0.b32.end [16/16] 0.0, 128
    %v352 = vpop.trf.xlu0
    %v353 = vpop.trf.xlu0
    %v354 = vpop.trf.xlu0
    %v355 = vpop.trf.xlu0
    %v356 = vpop.trf.xlu0
    %v357 = vpop.trf.xlu0
    %v358 = vpop.trf.xlu0
    %v359 = vpop.trf.xlu0
    %v360 = vpop.trf.xlu0
    %v361 = vpop.trf.xlu0
    %v362 = vpop.trf.xlu0
    %v363 = vpop.trf.xlu0
    %v364 = vpop.trf.xlu0
    %v365 = vpop.trf.xlu0
    %v366 = vpop.trf.xlu0
    %v367 = vpop.trf.xlu0
    %v369 = vsel %vm95, %v352, 0
    %v372 = vsel %vm95, %v353, 0
    %374 = vmatprep.subr.mxu0 0.0
    %375 = vmatpush1.msra.mxu0 0.0
    %376 = vmatprep.subr.mxu0 0.0
    %377 = vmatpush1.msra.mxu0 0.0
    %378 = vmatprep.subr.mxu0 0.0
    %379 = vmatpush1.msra.mxu0 0.0
    %380 = vmatprep.subr.mxu0 0.0
    %381 = vmatpush1.msra.mxu0 0.0
    %382 = vmatprep.subr.mxu0 0.0
    %383 = vmatpush1.msra.mxu0 0.0
    %384 = vmatprep.subr.mxu0 0.0
    %385 = vmatpush1.msra.mxu0 0.0
    %386 = vmatprep.subr.mxu0 0.0
    %387 = vmatpush1.msra.mxu0 0.0
    %388 = vmatprep.subr.mxu0 0.0
    %389 = vmatpush1.msra.mxu0 0.0
    %390 = vmatprep.subr.mxu0 0.0
    %391 = vmatpush1.msra.mxu0 0.0
    %392 = vmatprep.subr.mxu0 0.0
    %393 = vmatpush1.msra.mxu0 0.0
    %394 = vmatprep.subr.mxu0 0.0
    %395 = vmatpush1.msra.mxu0 0.0
    %396 = vmatprep.subr.mxu0 0.0
    %397 = vmatpush1.msra.mxu0 0.0
    %398 = vmatprep.subr.mxu0 0.0
    %399 = vmatpush1.msra.mxu0 0.0
    %400 = vmatprep.subr.mxu0 0.0
    %401 = vmatpush1.msra.mxu0 0.0
    %402 = vmatprep.subr.mxu0 0.0
    %403 = vmatpush1.msra.mxu0 %v277
    %404 = vmatprep.subr.mxu0 0.0
    %405 = vmatpush1.msra.mxu0 %v272
    %406 = vmatprep.subr.mxu0 0.0
    %407 = vmatpush2.msra.mxu0 0.0
    %408 = vmatprep.subr.mxu0 0.0
    %409 = vmatpush2.msra.mxu0 0.0
    %410 = vmatprep.subr.mxu0 0.0
    %411 = vmatpush2.msra.mxu0 0.0
    %412 = vmatprep.subr.mxu0 0.0
    %413 = vmatpush2.msra.mxu0 0.0
    %414 = vmatprep.subr.mxu0 0.0
    %415 = vmatpush2.msra.mxu0 0.0
    %416 = vmatprep.subr.mxu0 0.0
    %417 = vmatpush2.msra.mxu0 0.0
    %418 = vmatprep.subr.mxu0 0.0
    %419 = vmatpush2.msra.mxu0 0.0
    %420 = vmatprep.subr.mxu0 0.0
    %421 = vmatpush2.msra.mxu0 0.0
    %422 = vmatprep.subr.mxu0 0.0
    %423 = vmatpush2.msra.mxu0 0.0
    %424 = vmatprep.subr.mxu0 0.0
    %425 = vmatpush2.msra.mxu0 0.0
    %426 = vmatprep.subr.mxu0 0.0
    %427 = vmatpush2.msra.mxu0 0.0
    %428 = vmatprep.subr.mxu0 0.0
    %429 = vmatpush2.msra.mxu0 0.0
    %430 = vmatprep.subr.mxu0 0.0
    %431 = vmatpush2.msra.mxu0 0.0
    %432 = vmatprep.subr.mxu0 0.0
    %433 = vmatpush2.msra.mxu0 0.0
    %434 = vmatprep.subr.mxu0 0.0
    %435 = vmatpush2.msra.mxu0 0.0
    %436 = vmatprep.subr.mxu0 0.0
    %437 = vmatpush2.msra.mxu0 0.0
    %438 = vmatprep.mubr.f32.mxu0 0.0
    %439 = vmatmul.mubr.f32.gmra.mxu0 %v369
    %v440 = vpop.f32.mrf.mxu0
    %v441 = vadd.f32 0.0, %v440
    %v442 = vpop.f32.mrf.mxu0
    %443 = vmatprep.mubr.f32.mxu0 0.0
    %444 = vmatmul.mubr.f32.gmra.mxu0 %v372
    %v445 = vpop.f32.mrf.mxu0
    %v446 = vadd.f32 0.0, %v445
    %v447 = vpop.f32.mrf.mxu0
    %448 = vdwg.mxu0
    %451 = vrot.lane.b32.xlu0 %v334, 112
    %v452 = vpop.permute.xlu0 %451
    %453 = vrot.lane.b32.xlu0 %v335, 112
    %v454 = vpop.permute.xlu0 %453
    %457 = vxpose.xlu0.b32.start [1/16] %v452, 128
    %458 = vxpose.xlu0.b32.cont [2/16] %v454, 128
    %459 = vxpose.xlu0.b32.cont [3/16] 0.0, 128
    %460 = vxpose.xlu0.b32.cont [4/16] 0.0, 128
    %461 = vxpose.xlu0.b32.cont [5/16] 0.0, 128
    %462 = vxpose.xlu0.b32.cont [6/16] 0.0, 128
    %463 = vxpose.xlu0.b32.cont [7/16] 0.0, 128
    %464 = vxpose.xlu0.b32.cont [8/16] 0.0, 128
    %465 = vxpose.xlu0.b32.cont [9/16] 0.0, 128
    %466 = vxpose.xlu0.b32.cont [10/16] 0.0, 128
    %467 = vxpose.xlu0.b32.cont [11/16] 0.0, 128
    %468 = vxpose.xlu0.b32.cont [12/16] 0.0, 128
    %469 = vxpose.xlu0.b32.cont [13/16] 0.0, 128
    %470 = vxpose.xlu0.b32.cont [14/16] 0.0, 128
    %471 = vxpose.xlu0.b32.cont [15/16] 0.0, 128
    %472 = vxpose.xlu0.b32.end [16/16] 0.0, 128
    %v473 = vpop.trf.xlu0
    %v474 = vpop.trf.xlu0
    %v475 = vpop.trf.xlu0
    %v476 = vpop.trf.xlu0
    %v477 = vpop.trf.xlu0
    %v478 = vpop.trf.xlu0
    %v479 = vpop.trf.xlu0
    %v480 = vpop.trf.xlu0
    %v481 = vpop.trf.xlu0
    %v482 = vpop.trf.xlu0
    %v483 = vpop.trf.xlu0
    %v484 = vpop.trf.xlu0
    %v485 = vpop.trf.xlu0
    %v486 = vpop.trf.xlu0
    %v487 = vpop.trf.xlu0
    %v488 = vpop.trf.xlu0
    %491 = vrot.lane.b32.xlu0 %v272, 120
    %v492 = vpop.permute.xlu0 %491
    %493 = vrot.lane.b32.xlu0 %v277, 120
    %v494 = vpop.permute.xlu0 %493
    %v498 = vsel %vm95, %v473, 0
    %v501 = vsel %vm95, %v474, 0
    %503 = vmatprep.subr.mxu0 0.0
    %504 = vmatpush1.msra.mxu0 0.0
    %505 = vmatprep.subr.mxu0 0.0
    %506 = vmatpush1.msra.mxu0 0.0
    %507 = vmatprep.subr.mxu0 0.0
    %508 = vmatpush1.msra.mxu0 0.0
    %509 = vmatprep.subr.mxu0 0.0
    %510 = vmatpush1.msra.mxu0 0.0
    %511 = vmatprep.subr.mxu0 0.0
    %512 = vmatpush1.msra.mxu0 0.0
    %513 = vmatprep.subr.mxu0 0.0
    %514 = vmatpush1.msra.mxu0 0.0
    %515 = vmatprep.subr.mxu0 0.0
    %516 = vmatpush1.msra.mxu0 0.0
    %517 = vmatprep.subr.mxu0 0.0
    %518 = vmatpush1.msra.mxu0 0.0
    %519 = vmatprep.subr.mxu0 0.0
    %520 = vmatpush1.msra.mxu0 0.0
    %521 = vmatprep.subr.mxu0 0.0
    %522 = vmatpush1.msra.mxu0 0.0
    %523 = vmatprep.subr.mxu0 0.0
    %524 = vmatpush1.msra.mxu0 0.0
    %525 = vmatprep.subr.mxu0 0.0
    %526 = vmatpush1.msra.mxu0 0.0
    %527 = vmatprep.subr.mxu0 0.0
    %528 = vmatpush1.msra.mxu0 0.0
    %529 = vmatprep.subr.mxu0 0.0
    %530 = vmatpush1.msra.mxu0 0.0
    %531 = vmatprep.subr.mxu0 0.0
    %532 = vmatpush1.msra.mxu0 %v494
    %533 = vmatprep.subr.mxu0 0.0
    %534 = vmatpush1.msra.mxu0 %v492
    %535 = vmatprep.subr.mxu0 0.0
    %536 = vmatpush2.msra.mxu0 0.0
    %537 = vmatprep.subr.mxu0 0.0
    %538 = vmatpush2.msra.mxu0 0.0
    %539 = vmatprep.subr.mxu0 0.0
    %540 = vmatpush2.msra.mxu0 0.0
    %541 = vmatprep.subr.mxu0 0.0
    %542 = vmatpush2.msra.mxu0 0.0
    %543 = vmatprep.subr.mxu0 0.0
    %544 = vmatpush2.msra.mxu0 0.0
    %545 = vmatprep.subr.mxu0 0.0
    %546 = vmatpush2.msra.mxu0 0.0
    %547 = vmatprep.subr.mxu0 0.0
    %548 = vmatpush2.msra.mxu0 0.0
    %549 = vmatprep.subr.mxu0 0.0
    %550 = vmatpush2.msra.mxu0 0.0
    %551 = vmatprep.subr.mxu0 0.0
    %552 = vmatpush2.msra.mxu0 0.0
    %553 = vmatprep.subr.mxu0 0.0
    %554 = vmatpush2.msra.mxu0 0.0
    %555 = vmatprep.subr.mxu0 0.0
    %556 = vmatpush2.msra.mxu0 0.0
    %557 = vmatprep.subr.mxu0 0.0
    %558 = vmatpush2.msra.mxu0 0.0
    %559 = vmatprep.subr.mxu0 0.0
    %560 = vmatpush2.msra.mxu0 0.0
    %561 = vmatprep.subr.mxu0 0.0
    %562 = vmatpush2.msra.mxu0 0.0
    %563 = vmatprep.subr.mxu0 0.0
    %564 = vmatpush2.msra.mxu0 0.0
    %565 = vmatprep.subr.mxu0 0.0
    %566 = vmatpush2.msra.mxu0 0.0
    %567 = vmatprep.mubr.f32.mxu0 0.0
    %568 = vmatmul.mubr.f32.gmra.mxu0 %v498
    %v569 = vpop.f32.mrf.mxu0
    %v570 = vadd.f32 0.0, %v569
    %v571 = vpop.f32.mrf.mxu0
    %572 = vmatprep.mubr.f32.mxu0 0.0
    %573 = vmatmul.mubr.f32.gmra.mxu0 %v501
    %v574 = vpop.f32.mrf.mxu0
    %v575 = vadd.f32 0.0, %v574
    %v576 = vpop.f32.mrf.mxu0
    %577 = vdwg.mxu0
    %578 = vrot.lane.b32.xlu0 %v334, 96
    %v579 = vpop.permute.xlu0 %578
    %580 = vrot.lane.b32.xlu0 %v335, 96
    %v581 = vpop.permute.xlu0 %580
    %584 = vxpose.xlu0.b32.start [1/16] %v579, 128
    %585 = vxpose.xlu0.b32.cont [2/16] %v581, 128
    %586 = vxpose.xlu0.b32.cont [3/16] 0.0, 128
    %587 = vxpose.xlu0.b32.cont [4/16] 0.0, 128
    %588 = vxpose.xlu0.b32.cont [5/16] 0.0, 128
    %589 = vxpose.xlu0.b32.cont [6/16] 0.0, 128
    %590 = vxpose.xlu0.b32.cont [7/16] 0.0, 128
    %591 = vxpose.xlu0.b32.cont [8/16] 0.0, 128
    %592 = vxpose.xlu0.b32.cont [9/16] 0.0, 128
    %593 = vxpose.xlu0.b32.cont [10/16] 0.0, 128
    %594 = vxpose.xlu0.b32.cont [11/16] 0.0, 128
    %595 = vxpose.xlu0.b32.cont [12/16] 0.0, 128
    %596 = vxpose.xlu0.b32.cont [13/16] 0.0, 128
    %597 = vxpose.xlu0.b32.cont [14/16] 0.0, 128
    %598 = vxpose.xlu0.b32.cont [15/16] 0.0, 128
    %599 = vxpose.xlu0.b32.end [16/16] 0.0, 128
    %v600 = vpop.trf.xlu0
    %v601 = vpop.trf.xlu0
    %v602 = vpop.trf.xlu0
    %v603 = vpop.trf.xlu0
    %v604 = vpop.trf.xlu0
    %v605 = vpop.trf.xlu0
    %v606 = vpop.trf.xlu0
    %v607 = vpop.trf.xlu0
    %v608 = vpop.trf.xlu0
    %v609 = vpop.trf.xlu0
    %v610 = vpop.trf.xlu0
    %v611 = vpop.trf.xlu0
    %v612 = vpop.trf.xlu0
    %v613 = vpop.trf.xlu0
    %v614 = vpop.trf.xlu0
    %v615 = vpop.trf.xlu0
    %616 = vrot.lane.b32.xlu0 %v272, 112
    %v617 = vpop.permute.xlu0 %616
    %618 = vrot.lane.b32.xlu0 %v277, 112
    %v619 = vpop.permute.xlu0 %618
    %v623 = vsel %vm95, %v600, 0
    %v626 = vsel %vm95, %v601, 0
    %628 = vmatprep.subr.mxu0 0.0
    %629 = vmatpush1.msra.mxu0 0.0
    %630 = vmatprep.subr.mxu0 0.0
    %631 = vmatpush1.msra.mxu0 0.0
    %632 = vmatprep.subr.mxu0 0.0
    %633 = vmatpush1.msra.mxu0 0.0
    %634 = vmatprep.subr.mxu0 0.0
    %635 = vmatpush1.msra.mxu0 0.0
    %636 = vmatprep.subr.mxu0 0.0
    %637 = vmatpush1.msra.mxu0 0.0
    %638 = vmatprep.subr.mxu0 0.0
    %639 = vmatpush1.msra.mxu0 0.0
    %640 = vmatprep.subr.mxu0 0.0
    %641 = vmatpush1.msra.mxu0 0.0
    %642 = vmatprep.subr.mxu0 0.0
    %643 = vmatpush1.msra.mxu0 0.0
    %644 = vmatprep.subr.mxu0 0.0
    %645 = vmatpush1.msra.mxu0 0.0
    %646 = vmatprep.subr.mxu0 0.0
    %647 = vmatpush1.msra.mxu0 0.0
    %648 = vmatprep.subr.mxu0 0.0
    %649 = vmatpush1.msra.mxu0 0.0
    %650 = vmatprep.subr.mxu0 0.0
    %651 = vmatpush1.msra.mxu0 0.0
    %652 = vmatprep.subr.mxu0 0.0
    %653 = vmatpush1.msra.mxu0 0.0
    %654 = vmatprep.subr.mxu0 0.0
    %655 = vmatpush1.msra.mxu0 0.0
    %656 = vmatprep.subr.mxu0 0.0
    %657 = vmatpush1.msra.mxu0 %v619
    %658 = vmatprep.subr.mxu0 0.0
    %659 = vmatpush1.msra.mxu0 %v617
    %660 = vmatprep.subr.mxu0 0.0
    %661 = vmatpush2.msra.mxu0 0.0
    %662 = vmatprep.subr.mxu0 0.0
    %663 = vmatpush2.msra.mxu0 0.0
    %664 = vmatprep.subr.mxu0 0.0
    %665 = vmatpush2.msra.mxu0 0.0
    %666 = vmatprep.subr.mxu0 0.0
    %667 = vmatpush2.msra.mxu0 0.0
    %668 = vmatprep.subr.mxu0 0.0
    %669 = vmatpush2.msra.mxu0 0.0
    %670 = vmatprep.subr.mxu0 0.0
    %671 = vmatpush2.msra.mxu0 0.0
    %672 = vmatprep.subr.mxu0 0.0
    %673 = vmatpush2.msra.mxu0 0.0
    %674 = vmatprep.subr.mxu0 0.0
    %675 = vmatpush2.msra.mxu0 0.0
    %676 = vmatprep.subr.mxu0 0.0
    %677 = vmatpush2.msra.mxu0 0.0
    %678 = vmatprep.subr.mxu0 0.0
    %679 = vmatpush2.msra.mxu0 0.0
    %680 = vmatprep.subr.mxu0 0.0
    %681 = vmatpush2.msra.mxu0 0.0
    %682 = vmatprep.subr.mxu0 0.0
    %683 = vmatpush2.msra.mxu0 0.0
    %684 = vmatprep.subr.mxu0 0.0
    %685 = vmatpush2.msra.mxu0 0.0
    %686 = vmatprep.subr.mxu0 0.0
    %687 = vmatpush2.msra.mxu0 0.0
    %688 = vmatprep.subr.mxu0 0.0
    %689 = vmatpush2.msra.mxu0 0.0
    %690 = vmatprep.subr.mxu0 0.0
    %691 = vmatpush2.msra.mxu0 0.0
    %692 = vmatprep.mubr.f32.mxu0 0.0
    %693 = vmatmul.mubr.f32.gmra.mxu0 %v623
    %v694 = vpop.f32.mrf.mxu0
    %v695 = vadd.f32 0.0, %v694
    %v696 = vpop.f32.mrf.mxu0
    %697 = vmatprep.mubr.f32.mxu0 0.0
    %698 = vmatmul.mubr.f32.gmra.mxu0 %v626
    %v699 = vpop.f32.mrf.mxu0
    %v700 = vadd.f32 0.0, %v699
    %v701 = vpop.f32.mrf.mxu0
    %702 = vdwg.mxu0
    %703 = vrot.lane.b32.xlu0 %v334, 80
    %v704 = vpop.permute.xlu0 %703
    %705 = vrot.lane.b32.xlu0 %v335, 80
    %v706 = vpop.permute.xlu0 %705
    %709 = vxpose.xlu0.b32.start [1/16] %v704, 128
    %710 = vxpose.xlu0.b32.cont [2/16] %v706, 128
    %711 = vxpose.xlu0.b32.cont [3/16] 0.0, 128
    %712 = vxpose.xlu0.b32.cont [4/16] 0.0, 128
    %713 = vxpose.xlu0.b32.cont [5/16] 0.0, 128
    %714 = vxpose.xlu0.b32.cont [6/16] 0.0, 128
    %715 = vxpose.xlu0.b32.cont [7/16] 0.0, 128
    %716 = vxpose.xlu0.b32.cont [8/16] 0.0, 128
    %717 = vxpose.xlu0.b32.cont [9/16] 0.0, 128
    %718 = vxpose.xlu0.b32.cont [10/16] 0.0, 128
    %719 = vxpose.xlu0.b32.cont [11/16] 0.0, 128
    %720 = vxpose.xlu0.b32.cont [12/16] 0.0, 128
    %721 = vxpose.xlu0.b32.cont [13/16] 0.0, 128
    %722 = vxpose.xlu0.b32.cont [14/16] 0.0, 128
    %723 = vxpose.xlu0.b32.cont [15/16] 0.0, 128
    %724 = vxpose.xlu0.b32.end [16/16] 0.0, 128
    %v725 = vpop.trf.xlu0
    %v726 = vpop.trf.xlu0
    %v727 = vpop.trf.xlu0
    %v728 = vpop.trf.xlu0
    %v729 = vpop.trf.xlu0
    %v730 = vpop.trf.xlu0
    %v731 = vpop.trf.xlu0
    %v732 = vpop.trf.xlu0
    %v733 = vpop.trf.xlu0
    %v734 = vpop.trf.xlu0
    %v735 = vpop.trf.xlu0
    %v736 = vpop.trf.xlu0
    %v737 = vpop.trf.xlu0
    %v738 = vpop.trf.xlu0
    %v739 = vpop.trf.xlu0
    %v740 = vpop.trf.xlu0
    %741 = vrot.lane.b32.xlu0 %v272, 104
    %v742 = vpop.permute.xlu0 %741
    %743 = vrot.lane.b32.xlu0 %v277, 104
    %v744 = vpop.permute.xlu0 %743
    %v748 = vsel %vm95, %v725, 0
    %v751 = vsel %vm95, %v726, 0
    %753 = vmatprep.subr.mxu0 0.0
    %754 = vmatpush1.msra.mxu0 0.0
    %755 = vmatprep.subr.mxu0 0.0
    %756 = vmatpush1.msra.mxu0 0.0
    %757 = vmatprep.subr.mxu0 0.0
    %758 = vmatpush1.msra.mxu0 0.0
    %759 = vmatprep.subr.mxu0 0.0
    %760 = vmatpush1.msra.mxu0 0.0
    %761 = vmatprep.subr.mxu0 0.0
    %762 = vmatpush1.msra.mxu0 0.0
    %763 = vmatprep.subr.mxu0 0.0
    %764 = vmatpush1.msra.mxu0 0.0
    %765 = vmatprep.subr.mxu0 0.0
    %766 = vmatpush1.msra.mxu0 0.0
    %767 = vmatprep.subr.mxu0 0.0
    %768 = vmatpush1.msra.mxu0 0.0
    %769 = vmatprep.subr.mxu0 0.0
    %770 = vmatpush1.msra.mxu0 0.0
    %771 = vmatprep.subr.mxu0 0.0
    %772 = vmatpush1.msra.mxu0 0.0
    %773 = vmatprep.subr.mxu0 0.0
    %774 = vmatpush1.msra.mxu0 0.0
    %775 = vmatprep.subr.mxu0 0.0
    %776 = vmatpush1.msra.mxu0 0.0
    %777 = vmatprep.subr.mxu0 0.0
    %778 = vmatpush1.msra.mxu0 0.0
    %779 = vmatprep.subr.mxu0 0.0
    %780 = vmatpush1.msra.mxu0 0.0
    %781 = vmatprep.subr.mxu0 0.0
    %782 = vmatpush1.msra.mxu0 %v744
    %783 = vmatprep.subr.mxu0 0.0
    %784 = vmatpush1.msra.mxu0 %v742
    %785 = vmatprep.subr.mxu0 0.0
    %786 = vmatpush2.msra.mxu0 0.0
    %787 = vmatprep.subr.mxu0 0.0
    %788 = vmatpush2.msra.mxu0 0.0
    %789 = vmatprep.subr.mxu0 0.0
    %790 = vmatpush2.msra.mxu0 0.0
    %791 = vmatprep.subr.mxu0 0.0
    %792 = vmatpush2.msra.mxu0 0.0
    %793 = vmatprep.subr.mxu0 0.0
    %794 = vmatpush2.msra.mxu0 0.0
    %795 = vmatprep.subr.mxu0 0.0
    %796 = vmatpush2.msra.mxu0 0.0
    %797 = vmatprep.subr.mxu0 0.0
    %798 = vmatpush2.msra.mxu0 0.0
    %799 = vmatprep.subr.mxu0 0.0
    %800 = vmatpush2.msra.mxu0 0.0
    %801 = vmatprep.subr.mxu0 0.0
    %802 = vmatpush2.msra.mxu0 0.0
    %803 = vmatprep.subr.mxu0 0.0
    %804 = vmatpush2.msra.mxu0 0.0
    %805 = vmatprep.subr.mxu0 0.0
    %806 = vmatpush2.msra.mxu0 0.0
    %807 = vmatprep.subr.mxu0 0.0
    %808 = vmatpush2.msra.mxu0 0.0
    %809 = vmatprep.subr.mxu0 0.0
    %810 = vmatpush2.msra.mxu0 0.0
    %811 = vmatprep.subr.mxu0 0.0
    %812 = vmatpush2.msra.mxu0 0.0
    %813 = vmatprep.subr.mxu0 0.0
    %814 = vmatpush2.msra.mxu0 0.0
    %815 = vmatprep.subr.mxu0 0.0
    %816 = vmatpush2.msra.mxu0 0.0
    %817 = vmatprep.mubr.f32.mxu0 0.0
    %818 = vmatmul.mubr.f32.gmra.mxu0 %v748
    %v819 = vpop.f32.mrf.mxu0
    %v820 = vadd.f32 0.0, %v819
    %v821 = vpop.f32.mrf.mxu0
    %822 = vmatprep.mubr.f32.mxu0 0.0
    %823 = vmatmul.mubr.f32.gmra.mxu0 %v751
    %v824 = vpop.f32.mrf.mxu0
    %v825 = vadd.f32 0.0, %v824
    %v826 = vpop.f32.mrf.mxu0
    %827 = vdwg.mxu0
    %828 = vrot.lane.b32.xlu0 %v334, 64
    %v829 = vpop.permute.xlu0 %828
    %830 = vrot.lane.b32.xlu0 %v335, 64
    %v831 = vpop.permute.xlu0 %830
    %834 = vxpose.xlu0.b32.start [1/16] %v829, 128
    %835 = vxpose.xlu0.b32.cont [2/16] %v831, 128
    %836 = vxpose.xlu0.b32.cont [3/16] 0.0, 128
    %837 = vxpose.xlu0.b32.cont [4/16] 0.0, 128
    %838 = vxpose.xlu0.b32.cont [5/16] 0.0, 128
    %839 = vxpose.xlu0.b32.cont [6/16] 0.0, 128
    %840 = vxpose.xlu0.b32.cont [7/16] 0.0, 128
    %841 = vxpose.xlu0.b32.cont [8/16] 0.0, 128
    %842 = vxpose.xlu0.b32.cont [9/16] 0.0, 128
    %843 = vxpose.xlu0.b32.cont [10/16] 0.0, 128
    %844 = vxpose.xlu0.b32.cont [11/16] 0.0, 128
    %845 = vxpose.xlu0.b32.cont [12/16] 0.0, 128
    %846 = vxpose.xlu0.b32.cont [13/16] 0.0, 128
    %847 = vxpose.xlu0.b32.cont [14/16] 0.0, 128
    %848 = vxpose.xlu0.b32.cont [15/16] 0.0, 128
    %849 = vxpose.xlu0.b32.end [16/16] 0.0, 128
    %v850 = vpop.trf.xlu0
    %v851 = vpop.trf.xlu0
    %v852 = vpop.trf.xlu0
    %v853 = vpop.trf.xlu0
    %v854 = vpop.trf.xlu0
    %v855 = vpop.trf.xlu0
    %v856 = vpop.trf.xlu0
    %v857 = vpop.trf.xlu0
    %v858 = vpop.trf.xlu0
    %v859 = vpop.trf.xlu0
    %v860 = vpop.trf.xlu0
    %v861 = vpop.trf.xlu0
    %v862 = vpop.trf.xlu0
    %v863 = vpop.trf.xlu0
    %v864 = vpop.trf.xlu0
    %v865 = vpop.trf.xlu0
    %866 = vrot.lane.b32.xlu0 %v272, 96
    %v867 = vpop.permute.xlu0 %866
    %868 = vrot.lane.b32.xlu0 %v277, 96
    %v869 = vpop.permute.xlu0 %868
    %v873 = vsel %vm95, %v850, 0
    %v876 = vsel %vm95, %v851, 0
    %878 = vmatprep.subr.mxu0 0.0
    %879 = vmatpush1.msra.mxu0 0.0
    %880 = vmatprep.subr.mxu0 0.0
    %881 = vmatpush1.msra.mxu0 0.0
    %882 = vmatprep.subr.mxu0 0.0
    %883 = vmatpush1.msra.mxu0 0.0
    %884 = vmatprep.subr.mxu0 0.0
    %885 = vmatpush1.msra.mxu0 0.0
    %886 = vmatprep.subr.mxu0 0.0
    %887 = vmatpush1.msra.mxu0 0.0
    %888 = vmatprep.subr.mxu0 0.0
    %889 = vmatpush1.msra.mxu0 0.0
    %890 = vmatprep.subr.mxu0 0.0
    %891 = vmatpush1.msra.mxu0 0.0
    %892 = vmatprep.subr.mxu0 0.0
    %893 = vmatpush1.msra.mxu0 0.0
    %894 = vmatprep.subr.mxu0 0.0
    %895 = vmatpush1.msra.mxu0 0.0
    %896 = vmatprep.subr.mxu0 0.0
    %897 = vmatpush1.msra.mxu0 0.0
    %898 = vmatprep.subr.mxu0 0.0
    %899 = vmatpush1.msra.mxu0 0.0
    %900 = vmatprep.subr.mxu0 0.0
    %901 = vmatpush1.msra.mxu0 0.0
    %902 = vmatprep.subr.mxu0 0.0
    %903 = vmatpush1.msra.mxu0 0.0
    %904 = vmatprep.subr.mxu0 0.0
    %905 = vmatpush1.msra.mxu0 0.0
    %906 = vmatprep.subr.mxu0 0.0
    %907 = vmatpush1.msra.mxu0 %v869
    %908 = vmatprep.subr.mxu0 0.0
    %909 = vmatpush1.msra.mxu0 %v867
    %910 = vmatprep.subr.mxu0 0.0
    %911 = vmatpush2.msra.mxu0 0.0
    %912 = vmatprep.subr.mxu0 0.0
    %913 = vmatpush2.msra.mxu0 0.0
    %914 = vmatprep.subr.mxu0 0.0
    %915 = vmatpush2.msra.mxu0 0.0
    %916 = vmatprep.subr.mxu0 0.0
    %917 = vmatpush2.msra.mxu0 0.0
    %918 = vmatprep.subr.mxu0 0.0
    %919 = vmatpush2.msra.mxu0 0.0
    %920 = vmatprep.subr.mxu0 0.0
    %921 = vmatpush2.msra.mxu0 0.0
    %922 = vmatprep.subr.mxu0 0.0
    %923 = vmatpush2.msra.mxu0 0.0
    %924 = vmatprep.subr.mxu0 0.0
    %925 = vmatpush2.msra.mxu0 0.0
    %926 = vmatprep.subr.mxu0 0.0
    %927 = vmatpush2.msra.mxu0 0.0
    %928 = vmatprep.subr.mxu0 0.0
    %929 = vmatpush2.msra.mxu0 0.0
    %930 = vmatprep.subr.mxu0 0.0
    %931 = vmatpush2.msra.mxu0 0.0
    %932 = vmatprep.subr.mxu0 0.0
    %933 = vmatpush2.msra.mxu0 0.0
    %934 = vmatprep.subr.mxu0 0.0
    %935 = vmatpush2.msra.mxu0 0.0
    %936 = vmatprep.subr.mxu0 0.0
    %937 = vmatpush2.msra.mxu0 0.0
    %938 = vmatprep.subr.mxu0 0.0
    %939 = vmatpush2.msra.mxu0 0.0
    %940 = vmatprep.subr.mxu0 0.0
    %941 = vmatpush2.msra.mxu0 0.0
    %942 = vmatprep.mubr.f32.mxu0 0.0
    %943 = vmatmul.mubr.f32.gmra.mxu0 %v873
    %v944 = vpop.f32.mrf.mxu0
    %v945 = vadd.f32 0.0, %v944
    %v946 = vpop.f32.mrf.mxu0
    %947 = vmatprep.mubr.f32.mxu0 0.0
    %948 = vmatmul.mubr.f32.gmra.mxu0 %v876
    %v949 = vpop.f32.mrf.mxu0
    %v950 = vadd.f32 0.0, %v949
    %v951 = vpop.f32.mrf.mxu0
    %952 = vdwg.mxu0
    %953 = vrot.lane.b32.xlu0 %v334, 48
    %v954 = vpop.permute.xlu0 %953
    %955 = vrot.lane.b32.xlu0 %v335, 48
    %v956 = vpop.permute.xlu0 %955
    %959 = vxpose.xlu0.b32.start [1/16] %v954, 128
    %960 = vxpose.xlu0.b32.cont [2/16] %v956, 128
    %961 = vxpose.xlu0.b32.cont [3/16] 0.0, 128
    %962 = vxpose.xlu0.b32.cont [4/16] 0.0, 128
    %963 = vxpose.xlu0.b32.cont [5/16] 0.0, 128
    %964 = vxpose.xlu0.b32.cont [6/16] 0.0, 128
    %965 = vxpose.xlu0.b32.cont [7/16] 0.0, 128
    %966 = vxpose.xlu0.b32.cont [8/16] 0.0, 128
    %967 = vxpose.xlu0.b32.cont [9/16] 0.0, 128
    %968 = vxpose.xlu0.b32.cont [10/16] 0.0, 128
    %969 = vxpose.xlu0.b32.cont [11/16] 0.0, 128
    %970 = vxpose.xlu0.b32.cont [12/16] 0.0, 128
    %971 = vxpose.xlu0.b32.cont [13/16] 0.0, 128
    %972 = vxpose.xlu0.b32.cont [14/16] 0.0, 128
    %973 = vxpose.xlu0.b32.cont [15/16] 0.0, 128
    %974 = vxpose.xlu0.b32.end [16/16] 0.0, 128
    %v975 = vpop.trf.xlu0
    %v976 = vpop.trf.xlu0
    %v977 = vpop.trf.xlu0
    %v978 = vpop.trf.xlu0
    %v979 = vpop.trf.xlu0
    %v980 = vpop.trf.xlu0
    %v981 = vpop.trf.xlu0
    %v982 = vpop.trf.xlu0
    %v983 = vpop.trf.xlu0
    %v984 = vpop.trf.xlu0
    %v985 = vpop.trf.xlu0
    %v986 = vpop.trf.xlu0
    %v987 = vpop.trf.xlu0
    %v988 = vpop.trf.xlu0
    %v989 = vpop.trf.xlu0
    %v990 = vpop.trf.xlu0
    %991 = vrot.lane.b32.xlu0 %v272, 88
    %v992 = vpop.permute.xlu0 %991
    %993 = vrot.lane.b32.xlu0 %v277, 88
    %v994 = vpop.permute.xlu0 %993
    %v998 = vsel %vm95, %v975, 0
    %v1001 = vsel %vm95, %v976, 0
    %1003 = vmatprep.subr.mxu0 0.0
    %1004 = vmatpush1.msra.mxu0 0.0
    %1005 = vmatprep.subr.mxu0 0.0
    %1006 = vmatpush1.msra.mxu0 0.0
    %1007 = vmatprep.subr.mxu0 0.0
    %1008 = vmatpush1.msra.mxu0 0.0
    %1009 = vmatprep.subr.mxu0 0.0
    %1010 = vmatpush1.msra.mxu0 0.0
    %1011 = vmatprep.subr.mxu0 0.0
    %1012 = vmatpush1.msra.mxu0 0.0
    %1013 = vmatprep.subr.mxu0 0.0
    %1014 = vmatpush1.msra.mxu0 0.0
    %1015 = vmatprep.subr.mxu0 0.0
    %1016 = vmatpush1.msra.mxu0 0.0
    %1017 = vmatprep.subr.mxu0 0.0
    %1018 = vmatpush1.msra.mxu0 0.0
    %1019 = vmatprep.subr.mxu0 0.0
    %1020 = vmatpush1.msra.mxu0 0.0
    %1021 = vmatprep.subr.mxu0 0.0
    %1022 = vmatpush1.msra.mxu0 0.0
    %1023 = vmatprep.subr.mxu0 0.0
    %1024 = vmatpush1.msra.mxu0 0.0
    %1025 = vmatprep.subr.mxu0 0.0
    %1026 = vmatpush1.msra.mxu0 0.0
    %1027 = vmatprep.subr.mxu0 0.0
    %1028 = vmatpush1.msra.mxu0 0.0
    %1029 = vmatprep.subr.mxu0 0.0
    %1030 = vmatpush1.msra.mxu0 0.0
    %1031 = vmatprep.subr.mxu0 0.0
    %1032 = vmatpush1.msra.mxu0 %v994
    %1033 = vmatprep.subr.mxu0 0.0
    %1034 = vmatpush1.msra.mxu0 %v992
    %1035 = vmatprep.subr.mxu0 0.0
    %1036 = vmatpush2.msra.mxu0 0.0
    %1037 = vmatprep.subr.mxu0 0.0
    %1038 = vmatpush2.msra.mxu0 0.0
    %1039 = vmatprep.subr.mxu0 0.0
    %1040 = vmatpush2.msra.mxu0 0.0
    %1041 = vmatprep.subr.mxu0 0.0
    %1042 = vmatpush2.msra.mxu0 0.0
    %1043 = vmatprep.subr.mxu0 0.0
    %1044 = vmatpush2.msra.mxu0 0.0
    %1045 = vmatprep.subr.mxu0 0.0
    %1046 = vmatpush2.msra.mxu0 0.0
    %1047 = vmatprep.subr.mxu0 0.0
    %1048 = vmatpush2.msra.mxu0 0.0
    %1049 = vmatprep.subr.mxu0 0.0
    %1050 = vmatpush2.msra.mxu0 0.0
    %1051 = vmatprep.subr.mxu0 0.0
    %1052 = vmatpush2.msra.mxu0 0.0
    %1053 = vmatprep.subr.mxu0 0.0
    %1054 = vmatpush2.msra.mxu0 0.0
    %1055 = vmatprep.subr.mxu0 0.0
    %1056 = vmatpush2.msra.mxu0 0.0
    %1057 = vmatprep.subr.mxu0 0.0
    %1058 = vmatpush2.msra.mxu0 0.0
    %1059 = vmatprep.subr.mxu0 0.0
    %1060 = vmatpush2.msra.mxu0 0.0
    %1061 = vmatprep.subr.mxu0 0.0
    %1062 = vmatpush2.msra.mxu0 0.0
    %1063 = vmatprep.subr.mxu0 0.0
    %1064 = vmatpush2.msra.mxu0 0.0
    %1065 = vmatprep.subr.mxu0 0.0
    %1066 = vmatpush2.msra.mxu0 0.0
    %1067 = vmatprep.mubr.f32.mxu0 0.0
    %1068 = vmatmul.mubr.f32.gmra.mxu0 %v998
    %v1069 = vpop.f32.mrf.mxu0
    %v1070 = vadd.f32 0.0, %v1069
    %v1071 = vpop.f32.mrf.mxu0
    %1072 = vmatprep.mubr.f32.mxu0 0.0
    %1073 = vmatmul.mubr.f32.gmra.mxu0 %v1001
    %v1074 = vpop.f32.mrf.mxu0
    %v1075 = vadd.f32 0.0, %v1074
    %v1076 = vpop.f32.mrf.mxu0
    %1077 = vdwg.mxu0
    %1078 = vrot.lane.b32.xlu0 %v334, 32
    %v1079 = vpop.permute.xlu0 %1078
    %1080 = vrot.lane.b32.xlu0 %v335, 32
    %v1081 = vpop.permute.xlu0 %1080
    %1084 = vxpose.xlu0.b32.start [1/16] %v1079, 128
    %1085 = vxpose.xlu0.b32.cont [2/16] %v1081, 128
    %1086 = vxpose.xlu0.b32.cont [3/16] 0.0, 128
    %1087 = vxpose.xlu0.b32.cont [4/16] 0.0, 128
    %1088 = vxpose.xlu0.b32.cont [5/16] 0.0, 128
    %1089 = vxpose.xlu0.b32.cont [6/16] 0.0, 128
    %1090 = vxpose.xlu0.b32.cont [7/16] 0.0, 128
    %1091 = vxpose.xlu0.b32.cont [8/16] 0.0, 128
    %1092 = vxpose.xlu0.b32.cont [9/16] 0.0, 128
    %1093 = vxpose.xlu0.b32.cont [10/16] 0.0, 128
    %1094 = vxpose.xlu0.b32.cont [11/16] 0.0, 128
    %1095 = vxpose.xlu0.b32.cont [12/16] 0.0, 128
    %1096 = vxpose.xlu0.b32.cont [13/16] 0.0, 128
    %1097 = vxpose.xlu0.b32.cont [14/16] 0.0, 128
    %1098 = vxpose.xlu0.b32.cont [15/16] 0.0, 128
    %1099 = vxpose.xlu0.b32.end [16/16] 0.0, 128
    %v1100 = vpop.trf.xlu0
    %v1101 = vpop.trf.xlu0
    %v1102 = vpop.trf.xlu0
    %v1103 = vpop.trf.xlu0
    %v1104 = vpop.trf.xlu0
    %v1105 = vpop.trf.xlu0
    %v1106 = vpop.trf.xlu0
    %v1107 = vpop.trf.xlu0
    %v1108 = vpop.trf.xlu0
    %v1109 = vpop.trf.xlu0
    %v1110 = vpop.trf.xlu0
    %v1111 = vpop.trf.xlu0
    %v1112 = vpop.trf.xlu0
    %v1113 = vpop.trf.xlu0
    %v1114 = vpop.trf.xlu0
    %v1115 = vpop.trf.xlu0
    %1116 = vrot.lane.b32.xlu0 %v272, 80
    %v1117 = vpop.permute.xlu0 %1116
    %1118 = vrot.lane.b32.xlu0 %v277, 80
    %v1119 = vpop.permute.xlu0 %1118
    %v1123 = vsel %vm95, %v1100, 0
    %v1126 = vsel %vm95, %v1101, 0
    %1128 = vmatprep.subr.mxu0 0.0
    %1129 = vmatpush1.msra.mxu0 0.0
    %1130 = vmatprep.subr.mxu0 0.0
    %1131 = vmatpush1.msra.mxu0 0.0
    %1132 = vmatprep.subr.mxu0 0.0
    %1133 = vmatpush1.msra.mxu0 0.0
    %1134 = vmatprep.subr.mxu0 0.0
    %1135 = vmatpush1.msra.mxu0 0.0
    %1136 = vmatprep.subr.mxu0 0.0
    %1137 = vmatpush1.msra.mxu0 0.0
    %1138 = vmatprep.subr.mxu0 0.0
    %1139 = vmatpush1.msra.mxu0 0.0
    %1140 = vmatprep.subr.mxu0 0.0
    %1141 = vmatpush1.msra.mxu0 0.0
    %1142 = vmatprep.subr.mxu0 0.0
    %1143 = vmatpush1.msra.mxu0 0.0
    %1144 = vmatprep.subr.mxu0 0.0
    %1145 = vmatpush1.msra.mxu0 0.0
    %1146 = vmatprep.subr.mxu0 0.0
    %1147 = vmatpush1.msra.mxu0 0.0
    %1148 = vmatprep.subr.mxu0 0.0
    %1149 = vmatpush1.msra.mxu0 0.0
    %1150 = vmatprep.subr.mxu0 0.0
    %1151 = vmatpush1.msra.mxu0 0.0
    %1152 = vmatprep.subr.mxu0 0.0
    %1153 = vmatpush1.msra.mxu0 0.0
    %1154 = vmatprep.subr.mxu0 0.0
    %1155 = vmatpush1.msra.mxu0 0.0
    %1156 = vmatprep.subr.mxu0 0.0
    %1157 = vmatpush1.msra.mxu0 %v1119
    %1158 = vmatprep.subr.mxu0 0.0
    %1159 = vmatpush1.msra.mxu0 %v1117
    %1160 = vmatprep.subr.mxu0 0.0
    %1161 = vmatpush2.msra.mxu0 0.0
    %1162 = vmatprep.subr.mxu0 0.0
    %1163 = vmatpush2.msra.mxu0 0.0
    %1164 = vmatprep.subr.mxu0 0.0
    %1165 = vmatpush2.msra.mxu0 0.0
    %1166 = vmatprep.subr.mxu0 0.0
    %1167 = vmatpush2.msra.mxu0 0.0
    %1168 = vmatprep.subr.mxu0 0.0
    %1169 = vmatpush2.msra.mxu0 0.0
    %1170 = vmatprep.subr.mxu0 0.0
    %1171 = vmatpush2.msra.mxu0 0.0
    %1172 = vmatprep.subr.mxu0 0.0
    %1173 = vmatpush2.msra.mxu0 0.0
    %1174 = vmatprep.subr.mxu0 0.0
    %1175 = vmatpush2.msra.mxu0 0.0
    %1176 = vmatprep.subr.mxu0 0.0
    %1177 = vmatpush2.msra.mxu0 0.0
    %1178 = vmatprep.subr.mxu0 0.0
    %1179 = vmatpush2.msra.mxu0 0.0
    %1180 = vmatprep.subr.mxu0 0.0
    %1181 = vmatpush2.msra.mxu0 0.0
    %1182 = vmatprep.subr.mxu0 0.0
    %1183 = vmatpush2.msra.mxu0 0.0
    %1184 = vmatprep.subr.mxu0 0.0
    %1185 = vmatpush2.msra.mxu0 0.0
    %1186 = vmatprep.subr.mxu0 0.0
    %1187 = vmatpush2.msra.mxu0 0.0
    %1188 = vmatprep.subr.mxu0 0.0
    %1189 = vmatpush2.msra.mxu0 0.0
    %1190 = vmatprep.subr.mxu0 0.0
    %1191 = vmatpush2.msra.mxu0 0.0
    %1192 = vmatprep.mubr.f32.mxu0 0.0
    %1193 = vmatmul.mubr.f32.gmra.mxu0 %v1123
    %v1194 = vpop.f32.mrf.mxu0
    %v1195 = vadd.f32 0.0, %v1194
    %v1196 = vpop.f32.mrf.mxu0
    %1197 = vmatprep.mubr.f32.mxu0 0.0
    %1198 = vmatmul.mubr.f32.gmra.mxu0 %v1126
    %v1199 = vpop.f32.mrf.mxu0
    %v1200 = vadd.f32 0.0, %v1199
    %v1201 = vpop.f32.mrf.mxu0
    %1202 = vdwg.mxu0
    %1203 = vrot.lane.b32.xlu0 %v334, 16
    %v1204 = vpop.permute.xlu0 %1203
    %1205 = vrot.lane.b32.xlu0 %v335, 16
    %v1206 = vpop.permute.xlu0 %1205
    %1209 = vxpose.xlu0.b32.start [1/16] %v1204, 128
    %1210 = vxpose.xlu0.b32.cont [2/16] %v1206, 128
    %1211 = vxpose.xlu0.b32.cont [3/16] 0.0, 128
    %1212 = vxpose.xlu0.b32.cont [4/16] 0.0, 128
    %1213 = vxpose.xlu0.b32.cont [5/16] 0.0, 128
    %1214 = vxpose.xlu0.b32.cont [6/16] 0.0, 128
    %1215 = vxpose.xlu0.b32.cont [7/16] 0.0, 128
    %1216 = vxpose.xlu0.b32.cont [8/16] 0.0, 128
    %1217 = vxpose.xlu0.b32.cont [9/16] 0.0, 128
    %1218 = vxpose.xlu0.b32.cont [10/16] 0.0, 128
    %1219 = vxpose.xlu0.b32.cont [11/16] 0.0, 128
    %1220 = vxpose.xlu0.b32.cont [12/16] 0.0, 128
    %1221 = vxpose.xlu0.b32.cont [13/16] 0.0, 128
    %1222 = vxpose.xlu0.b32.cont [14/16] 0.0, 128
    %1223 = vxpose.xlu0.b32.cont [15/16] 0.0, 128
    %1224 = vxpose.xlu0.b32.end [16/16] 0.0, 128
    %v1225 = vpop.trf.xlu0
    %v1226 = vpop.trf.xlu0
    %v1227 = vpop.trf.xlu0
    %v1228 = vpop.trf.xlu0
    %v1229 = vpop.trf.xlu0
    %v1230 = vpop.trf.xlu0
    %v1231 = vpop.trf.xlu0
    %v1232 = vpop.trf.xlu0
    %v1233 = vpop.trf.xlu0
    %v1234 = vpop.trf.xlu0
    %v1235 = vpop.trf.xlu0
    %v1236 = vpop.trf.xlu0
    %v1237 = vpop.trf.xlu0
    %v1238 = vpop.trf.xlu0
    %v1239 = vpop.trf.xlu0
    %v1240 = vpop.trf.xlu0
    %1241 = vrot.lane.b32.xlu0 %v272, 72
    %v1242 = vpop.permute.xlu0 %1241
    %1243 = vrot.lane.b32.xlu0 %v277, 72
    %v1244 = vpop.permute.xlu0 %1243
    %v1248 = vsel %vm95, %v1225, 0
    %v1251 = vsel %vm95, %v1226, 0
    %1253 = vmatprep.subr.mxu0 0.0
    %1254 = vmatpush1.msra.mxu0 0.0
    %1255 = vmatprep.subr.mxu0 0.0
    %1256 = vmatpush1.msra.mxu0 0.0
    %1257 = vmatprep.subr.mxu0 0.0
    %1258 = vmatpush1.msra.mxu0 0.0
    %1259 = vmatprep.subr.mxu0 0.0
    %1260 = vmatpush1.msra.mxu0 0.0
    %1261 = vmatprep.subr.mxu0 0.0
    %1262 = vmatpush1.msra.mxu0 0.0
    %1263 = vmatprep.subr.mxu0 0.0
    %1264 = vmatpush1.msra.mxu0 0.0
    %1265 = vmatprep.subr.mxu0 0.0
    %1266 = vmatpush1.msra.mxu0 0.0
    %1267 = vmatprep.subr.mxu0 0.0
    %1268 = vmatpush1.msra.mxu0 0.0
    %1269 = vmatprep.subr.mxu0 0.0
    %1270 = vmatpush1.msra.mxu0 0.0
    %1271 = vmatprep.subr.mxu0 0.0
    %1272 = vmatpush1.msra.mxu0 0.0
    %1273 = vmatprep.subr.mxu0 0.0
    %1274 = vmatpush1.msra.mxu0 0.0
    %1275 = vmatprep.subr.mxu0 0.0
    %1276 = vmatpush1.msra.mxu0 0.0
    %1277 = vmatprep.subr.mxu0 0.0
    %1278 = vmatpush1.msra.mxu0 0.0
    %1279 = vmatprep.subr.mxu0 0.0
    %1280 = vmatpush1.msra.mxu0 0.0
    %1281 = vmatprep.subr.mxu0 0.0
    %1282 = vmatpush1.msra.mxu0 %v1244
    %1283 = vmatprep.subr.mxu0 0.0
    %1284 = vmatpush1.msra.mxu0 %v1242
    %1285 = vmatprep.subr.mxu0 0.0
    %1286 = vmatpush2.msra.mxu0 0.0
    %1287 = vmatprep.subr.mxu0 0.0
    %1288 = vmatpush2.msra.mxu0 0.0
    %1289 = vmatprep.subr.mxu0 0.0
    %1290 = vmatpush2.msra.mxu0 0.0
    %1291 = vmatprep.subr.mxu0 0.0
    %1292 = vmatpush2.msra.mxu0 0.0
    %1293 = vmatprep.subr.mxu0 0.0
    %1294 = vmatpush2.msra.mxu0 0.0
    %1295 = vmatprep.subr.mxu0 0.0
    %1296 = vmatpush2.msra.mxu0 0.0
    %1297 = vmatprep.subr.mxu0 0.0
    %1298 = vmatpush2.msra.mxu0 0.0
    %1299 = vmatprep.subr.mxu0 0.0
    %1300 = vmatpush2.msra.mxu0 0.0
    %1301 = vmatprep.subr.mxu0 0.0
    %1302 = vmatpush2.msra.mxu0 0.0
    %1303 = vmatprep.subr.mxu0 0.0
    %1304 = vmatpush2.msra.mxu0 0.0
    %1305 = vmatprep.subr.mxu0 0.0
    %1306 = vmatpush2.msra.mxu0 0.0
    %1307 = vmatprep.subr.mxu0 0.0
    %1308 = vmatpush2.msra.mxu0 0.0
    %1309 = vmatprep.subr.mxu0 0.0
    %1310 = vmatpush2.msra.mxu0 0.0
    %1311 = vmatprep.subr.mxu0 0.0
    %1312 = vmatpush2.msra.mxu0 0.0
    %1313 = vmatprep.subr.mxu0 0.0
    %1314 = vmatpush2.msra.mxu0 0.0
    %1315 = vmatprep.subr.mxu0 0.0
    %1316 = vmatpush2.msra.mxu0 0.0
    %1317 = vmatprep.mubr.f32.mxu0 0.0
    %1318 = vmatmul.mubr.f32.gmra.mxu0 %v1248
    %v1319 = vpop.f32.mrf.mxu0
    %v1320 = vadd.f32 0.0, %v1319
    %v1321 = vpop.f32.mrf.mxu0
    %1322 = vmatprep.mubr.f32.mxu0 0.0
    %1323 = vmatmul.mubr.f32.gmra.mxu0 %v1251
    %v1324 = vpop.f32.mrf.mxu0
    %v1325 = vadd.f32 0.0, %v1324
    %v1326 = vpop.f32.mrf.mxu0
    %1327 = vdwg.mxu0
    %1330 = vrot.lane.b32.xlu0 %v570, 8
    %v1331 = vpop.permute.xlu0 %1330
    %1332 = vrot.lane.b32.xlu0 %v575, 8
    %v1333 = vpop.permute.xlu0 %1332
    %1338 = vrot.lane.b32.xlu0 %v695, 16
    %v1339 = vpop.permute.xlu0 %1338
    %1340 = vrot.lane.b32.xlu0 %v700, 16
    %v1341 = vpop.permute.xlu0 %1340
    %1346 = vrot.lane.b32.xlu0 %v820, 24
    %v1347 = vpop.permute.xlu0 %1346
    %1348 = vrot.lane.b32.xlu0 %v825, 24
    %v1349 = vpop.permute.xlu0 %1348
    %1354 = vrot.lane.b32.xlu0 %v945, 32
    %v1355 = vpop.permute.xlu0 %1354
    %1356 = vrot.lane.b32.xlu0 %v950, 32
    %v1357 = vpop.permute.xlu0 %1356
    %1362 = vrot.lane.b32.xlu0 %v1070, 40
    %v1363 = vpop.permute.xlu0 %1362
    %1364 = vrot.lane.b32.xlu0 %v1075, 40
    %v1365 = vpop.permute.xlu0 %1364
    %1370 = vrot.lane.b32.xlu0 %v1195, 48
    %v1371 = vpop.permute.xlu0 %1370
    %1372 = vrot.lane.b32.xlu0 %v1200, 48
    %v1373 = vpop.permute.xlu0 %1372
    %1378 = vrot.lane.b32.xlu0 %v1320, 56
    %v1379 = vpop.permute.xlu0 %1378
    %1380 = vrot.lane.b32.xlu0 %v1325, 56
    %v1381 = vpop.permute.xlu0 %1380
    %v1384 = vsel %vm121, %v441, %v1331
    %v1385 = vsel %vm121, %v446, %v1333
    %v1386 = vsel %vm95, %v1384, %v1339
    %v1387 = vsel %vm95, %v1385, %v1341
    %vm1388 = vcmask 195584
    %v1389 = vsel %vm1388, %v1386, %v1347
    %v1390 = vsel %vm1388, %v1387, %v1349
    %v1391 = vsel %vm98, %v1389, %v1355
    %v1392 = vsel %vm98, %v1390, %v1357
    %vm1393 = vcmask 326656
    %v1394 = vsel %vm1393, %v1391, %v1363
    %v1395 = vsel %vm1393, %v1392, %v1365
    %v1396 = vsel %vm101, %v1394, %v1371
    %v1397 = vsel %vm101, %v1395, %v1373
    %vm1398 = vcmask 457728
    %v1399 = vsel %vm1398, %v1396, %v1379
    %v1400 = vsel %vm1398, %v1397, %v1381
    %v1401 = vld [vmem:[#allocation2 + $0x18] ss:$0 sm:$0xff]
    %v1402 = vadd.f32 %v1399, %v1401
    %v1403 = vadd.f32 %v1400, %v1401
    %v1404 = vmax.f32 %v1402, 0.0
    %v1405 = vmax.f32 %v1403, 0.0
    %v1406 = vld [vmem:[#allocation4] sm:$0xff]
    %v1407 = vld [vmem:[#allocation4 + $0x8] sm:$0xff]
    %v1408 = vld [vmem:[#allocation4 + $0x10] sm:$0xff]
    %v1409 = vld [vmem:[#allocation4 + $0x18] sm:$0xff]
    %v1410 = vld [vmem:[#allocation4 + $0x20] sm:$0xff]
    %v1411 = vld [vmem:[#allocation4 + $0x28] sm:$0xff]
    %v1412 = vld [vmem:[#allocation4 + $0x30] sm:$0xff]
    %v1413 = vld [vmem:[#allocation4 + $0x38] sm:$0xff]
    %v1415 = vsel %vm104, %v1404, 0
    %v1418 = vsel %vm104, %v1405, 0
    %1420 = vmatprep.subr.mxu0 0.0
    %1421 = vmatpush1.msra.mxu0 0.0
    %1422 = vmatprep.subr.mxu0 0.0
    %1423 = vmatpush1.msra.mxu0 0.0
    %1424 = vmatprep.subr.mxu0 0.0
    %1425 = vmatpush1.msra.mxu0 0.0
    %1426 = vmatprep.subr.mxu0 0.0
    %1427 = vmatpush1.msra.mxu0 0.0
    %1428 = vmatprep.subr.mxu0 0.0
    %1429 = vmatpush1.msra.mxu0 0.0
    %1430 = vmatprep.subr.mxu0 0.0
    %1431 = vmatpush1.msra.mxu0 0.0
    %1432 = vmatprep.subr.mxu0 0.0
    %1433 = vmatpush1.msra.mxu0 0.0
    %1434 = vmatprep.subr.mxu0 0.0
    %1435 = vmatpush1.msra.mxu0 0.0
    %1436 = vmatprep.subr.mxu0 0.0
    %1437 = vmatpush1.msra.mxu0 %v1413
    %1438 = vmatprep.subr.mxu0 0.0
    %1439 = vmatpush1.msra.mxu0 %v1412
    %1440 = vmatprep.subr.mxu0 0.0
    %1441 = vmatpush1.msra.mxu0 %v1411
    %1442 = vmatprep.subr.mxu0 0.0
    %1443 = vmatpush1.msra.mxu0 %v1410
    %1444 = vmatprep.subr.mxu0 0.0
    %1445 = vmatpush1.msra.mxu0 %v1409
    %1446 = vmatprep.subr.mxu0 0.0
    %1447 = vmatpush1.msra.mxu0 %v1408
    %1448 = vmatprep.subr.mxu0 0.0
    %1449 = vmatpush1.msra.mxu0 %v1407
    %1450 = vmatprep.subr.mxu0 0.0
    %1451 = vmatpush1.msra.mxu0 %v1406
    %1452 = vmatprep.subr.mxu0 0.0
    %1453 = vmatpush2.msra.mxu0 0.0
    %1454 = vmatprep.subr.mxu0 0.0
    %1455 = vmatpush2.msra.mxu0 0.0
    %1456 = vmatprep.subr.mxu0 0.0
    %1457 = vmatpush2.msra.mxu0 0.0
    %1458 = vmatprep.subr.mxu0 0.0
    %1459 = vmatpush2.msra.mxu0 0.0
    %1460 = vmatprep.subr.mxu0 0.0
    %1461 = vmatpush2.msra.mxu0 0.0
    %1462 = vmatprep.subr.mxu0 0.0
    %1463 = vmatpush2.msra.mxu0 0.0
    %1464 = vmatprep.subr.mxu0 0.0
    %1465 = vmatpush2.msra.mxu0 0.0
    %1466 = vmatprep.subr.mxu0 0.0
    %1467 = vmatpush2.msra.mxu0 0.0
    %1468 = vmatprep.subr.mxu0 0.0
    %1469 = vmatpush2.msra.mxu0 0.0
    %1470 = vmatprep.subr.mxu0 0.0
    %1471 = vmatpush2.msra.mxu0 0.0
    %1472 = vmatprep.subr.mxu0 0.0
    %1473 = vmatpush2.msra.mxu0 0.0
    %1474 = vmatprep.subr.mxu0 0.0
    %1475 = vmatpush2.msra.mxu0 0.0
    %1476 = vmatprep.subr.mxu0 0.0
    %1477 = vmatpush2.msra.mxu0 0.0
    %1478 = vmatprep.subr.mxu0 0.0
    %1479 = vmatpush2.msra.mxu0 0.0
    %1480 = vmatprep.subr.mxu0 0.0
    %1481 = vmatpush2.msra.mxu0 0.0
    %1482 = vmatprep.subr.mxu0 0.0
    %1483 = vmatpush2.msra.mxu0 0.0
    %1484 = vmatprep.mubr.f32.mxu0 0.0
    %1485 = vmatmul.mubr.f32.gmra.mxu0 %v1415
    %v1486 = vpop.f32.mrf.mxu0
    %v1487 = vadd.f32 0.0, %v1486
    %v1488 = vpop.f32.mrf.mxu0
    %1489 = vmatprep.mubr.f32.mxu0 0.0
    %1490 = vmatmul.mubr.f32.gmra.mxu0 %v1418
    %v1491 = vpop.f32.mrf.mxu0
    %v1492 = vadd.f32 0.0, %v1491
    %v1493 = vpop.f32.mrf.mxu0
    %1494 = vdwg.mxu0
    %1497 = vrot.lane.b32.xlu0 %v1487, 112
    %v1498 = vpop.permute.xlu0 %1497
    %1499 = vrot.lane.b32.xlu0 %v1492, 112
    %v1500 = vpop.permute.xlu0 %1499
    %v1503 = vsel %vm286, %v1498, 0.0
    %v1504 = vsel %vm287, %v1500, 0.0
    %v1505 = vsel %vm95, %v1503, 0.0
    %v1506 = vsel %vm95, %v1504, 0.0
    %v1507 = vadd.f32 %v1505, %v1506
    %v1508 = vrot.slane %v1507, 4
    %v1509 = vadd.f32 %v1507, %v1508
    %v1510 = vrot.slane %v1509, 2
    %v1511 = vadd.f32 %v1509, %v1510
    %v1512 = vrot.slane %v1511, 1
    %v1513 = vadd.f32 %v1511, %v1512
    %v1514 = vadd.f32 %v1487, %v1513
    %v1515 = vadd.f32 %v1492, %v1513
    %vm1516 = vcmp.gt.f32.partialorder %v1514, 0.0
    %vm1517 = vcmp.gt.f32.partialorder %v1515, 0.0
    %v1518 = vmul.f32 %v1514, 0.2
    %v1519 = vmul.f32 %v1515, 0.2
    %v1520 = vsel %vm1516, %v1514, %v1518
    %v1521 = vsel %vm1517, %v1515, %v1519
    %v1522 = vsel %vm49, %v1520, -1e+30
    %v1523 = vsel %vm50, %v1521, -1e+30
    %v1524 = vsel %vm95, %v1522, -inf
    %v1525 = vsel %vm95, %v1523, -inf
    %v1526 = vmax.f32 %v1524, %v1525
    %v1527 = vrot.slane %v1526, 4
    %v1528 = vmax.f32 %v1526, %v1527
    %v1529 = vrot.slane %v1528, 2
    %v1530 = vmax.f32 %v1528, %v1529
    %v1531 = vrot.slane %v1530, 1
    %v1532 = vmax.f32 %v1530, %v1531
    %v1533 = vsub.f32 %v1522, %v1532
    %v1534 = vsub.f32 %v1523, %v1532
    %v1535 = vmul.f32 %v1533, 1.442695
    %v1536 = vpow.pop %v1535
    %v1537 = vmul.f32 %v1534, 1.442695
    %v1538 = vpow.pop %v1537
    %v1539 = vsel %vm49, %v1536, 0.0
    %v1540 = vsel %vm50, %v1538, 0.0
    %v1541 = vsel %vm95, %v1539, 0.0
    %v1542 = vsel %vm95, %v1540, 0.0
    %v1543 = vadd.f32 %v1541, %v1542
    %v1544 = vrot.slane %v1543, 4
    %v1545 = vadd.f32 %v1543, %v1544
    %v1546 = vrot.slane %v1545, 2
    %v1547 = vadd.f32 %v1545, %v1546
    %v1548 = vrot.slane %v1547, 1
    %v1549 = vadd.f32 %v1547, %v1548
    %v1550 = vmax.f32 %v1549, 1e-20
    %v1551 = vrcp.pop %v1550
    %v1552 = vmul.f32 %v1550, %v1551
    %v1553 = vsub.f32 2.0, %v1552
    %v1554 = vmul.f32 %v1551, %v1553
    %v1555 = vmul.f32 %v1539, %v1554
    %v1556 = vmul.f32 %v1540, %v1554
    %1557 = vxpose.xlu0.b32.start [1/16] %v1555, 128
    %1558 = vxpose.xlu0.b32.cont [2/16] %v1556, 128
    %1559 = vxpose.xlu0.b32.cont [3/16] 0.0, 128
    %1560 = vxpose.xlu0.b32.cont [4/16] 0.0, 128
    %1561 = vxpose.xlu0.b32.cont [5/16] 0.0, 128
    %1562 = vxpose.xlu0.b32.cont [6/16] 0.0, 128
    %1563 = vxpose.xlu0.b32.cont [7/16] 0.0, 128
    %1564 = vxpose.xlu0.b32.cont [8/16] 0.0, 128
    %1565 = vxpose.xlu0.b32.cont [9/16] 0.0, 128
    %1566 = vxpose.xlu0.b32.cont [10/16] 0.0, 128
    %1567 = vxpose.xlu0.b32.cont [11/16] 0.0, 128
    %1568 = vxpose.xlu0.b32.cont [12/16] 0.0, 128
    %1569 = vxpose.xlu0.b32.cont [13/16] 0.0, 128
    %1570 = vxpose.xlu0.b32.cont [14/16] 0.0, 128
    %1571 = vxpose.xlu0.b32.cont [15/16] 0.0, 128
    %1572 = vxpose.xlu0.b32.end [16/16] 0.0, 128
    %v1573 = vpop.trf.xlu0
    %v1574 = vpop.trf.xlu0
    %v1575 = vpop.trf.xlu0
    %v1576 = vpop.trf.xlu0
    %v1577 = vpop.trf.xlu0
    %v1578 = vpop.trf.xlu0
    %v1579 = vpop.trf.xlu0
    %v1580 = vpop.trf.xlu0
    %v1581 = vpop.trf.xlu0
    %v1582 = vpop.trf.xlu0
    %v1583 = vpop.trf.xlu0
    %v1584 = vpop.trf.xlu0
    %v1585 = vpop.trf.xlu0
    %v1586 = vpop.trf.xlu0
    %v1587 = vpop.trf.xlu0
    %v1588 = vpop.trf.xlu0
    %1589 = vrot.lane.b32.xlu0 %v1487, 96
    %v1590 = vpop.permute.xlu0 %1589
    %1591 = vrot.lane.b32.xlu0 %v1492, 96
    %v1592 = vpop.permute.xlu0 %1591
    %1596 = vrot.lane.b32.xlu0 %v1401, 64
    %v1597 = vpop.permute.xlu0 %1596
    %v1600 = vsel %vm95, %v1573, 0
    %v1603 = vsel %vm95, %v1574, 0
    %1605 = vmatprep.subr.mxu0 0.0
    %1606 = vmatpush1.msra.mxu0 0.0
    %1607 = vmatprep.subr.mxu0 0.0
    %1608 = vmatpush1.msra.mxu0 0.0
    %1609 = vmatprep.subr.mxu0 0.0
    %1610 = vmatpush1.msra.mxu0 0.0
    %1611 = vmatprep.subr.mxu0 0.0
    %1612 = vmatpush1.msra.mxu0 0.0
    %1613 = vmatprep.subr.mxu0 0.0
    %1614 = vmatpush1.msra.mxu0 0.0
    %1615 = vmatprep.subr.mxu0 0.0
    %1616 = vmatpush1.msra.mxu0 0.0
    %1617 = vmatprep.subr.mxu0 0.0
    %1618 = vmatpush1.msra.mxu0 0.0
    %1619 = vmatprep.subr.mxu0 0.0
    %1620 = vmatpush1.msra.mxu0 0.0
    %1621 = vmatprep.subr.mxu0 0.0
    %1622 = vmatpush1.msra.mxu0 0.0
    %1623 = vmatprep.subr.mxu0 0.0
    %1624 = vmatpush1.msra.mxu0 0.0
    %1625 = vmatprep.subr.mxu0 0.0
    %1626 = vmatpush1.msra.mxu0 0.0
    %1627 = vmatprep.subr.mxu0 0.0
    %1628 = vmatpush1.msra.mxu0 0.0
    %1629 = vmatprep.subr.mxu0 0.0
    %1630 = vmatpush1.msra.mxu0 0.0
    %1631 = vmatprep.subr.mxu0 0.0
    %1632 = vmatpush1.msra.mxu0 0.0
    %1633 = vmatprep.subr.mxu0 0.0
    %1634 = vmatpush1.msra.mxu0 %v1592
    %1635 = vmatprep.subr.mxu0 0.0
    %1636 = vmatpush1.msra.mxu0 %v1590
    %1637 = vmatprep.subr.mxu0 0.0
    %1638 = vmatpush2.msra.mxu0 0.0
    %1639 = vmatprep.subr.mxu0 0.0
    %1640 = vmatpush2.msra.mxu0 0.0
    %1641 = vmatprep.subr.mxu0 0.0
    %1642 = vmatpush2.msra.mxu0 0.0
    %1643 = vmatprep.subr.mxu0 0.0
    %1644 = vmatpush2.msra.mxu0 0.0
    %1645 = vmatprep.subr.mxu0 0.0
    %1646 = vmatpush2.msra.mxu0 0.0
    %1647 = vmatprep.subr.mxu0 0.0
    %1648 = vmatpush2.msra.mxu0 0.0
    %1649 = vmatprep.subr.mxu0 0.0
    %1650 = vmatpush2.msra.mxu0 0.0
    %1651 = vmatprep.subr.mxu0 0.0
    %1652 = vmatpush2.msra.mxu0 0.0
    %1653 = vmatprep.subr.mxu0 0.0
    %1654 = vmatpush2.msra.mxu0 0.0
    %1655 = vmatprep.subr.mxu0 0.0
    %1656 = vmatpush2.msra.mxu0 0.0
    %1657 = vmatprep.subr.mxu0 0.0
    %1658 = vmatpush2.msra.mxu0 0.0
    %1659 = vmatprep.subr.mxu0 0.0
    %1660 = vmatpush2.msra.mxu0 0.0
    %1661 = vmatprep.subr.mxu0 0.0
    %1662 = vmatpush2.msra.mxu0 0.0
    %1663 = vmatprep.subr.mxu0 0.0
    %1664 = vmatpush2.msra.mxu0 0.0
    %1665 = vmatprep.subr.mxu0 0.0
    %1666 = vmatpush2.msra.mxu0 0.0
    %1667 = vmatprep.subr.mxu0 0.0
    %1668 = vmatpush2.msra.mxu0 0.0
    %1669 = vmatprep.mubr.f32.mxu0 0.0
    %1670 = vmatmul.mubr.f32.gmra.mxu0 %v1600
    %v1671 = vpop.f32.mrf.mxu0
    %v1672 = vadd.f32 %v1597, %v1671
    %v1673 = vpop.f32.mrf.mxu0
    %1674 = vmatprep.mubr.f32.mxu0 0.0
    %1675 = vmatmul.mubr.f32.gmra.mxu0 %v1603
    %v1676 = vpop.f32.mrf.mxu0
    %v1677 = vadd.f32 %v1597, %v1676
    %v1678 = vpop.f32.mrf.mxu0
    %1679 = vdwg.mxu0
    %vm1680 = vcmask 31744
    %1681 = vst.msk [vmem:[%s4] sm:$0xff] %vm1680, %v1672
    %1682 = vst.msk [vmem:[%s4 + $0x8] sm:$0xff] %vm1680, %v1677
    // Predicated region
    $region26: #{tpu_custom_call.1} parent=1 // pred_check
      _
    $region27: #{tpu_custom_call.1} parent=1 // pred_check_branch
      %1684 = sbr.rel (0) target = $region29
    $region28: #{tpu_custom_call.1} parent=1 // pred_region
      _
    $region29: #{tpu_custom_call.1} parent=1 // pred_fallthru
      _
    // Predicated region
    $region30: #{tpu_custom_call.1} parent=1 // pred_check
      _
    $region31: #{tpu_custom_call.1} parent=1 // pred_check_branch
      %1686 = sbr.rel (0) target = $region33
    $region32: #{tpu_custom_call.1} parent=1 // pred_region
      _
    $region33: #{tpu_custom_call.1} parent=1 // pred_fallthru
      _
    %1687 = vsyncpa [#allocation3], 1
    %1688 = vsyncpa [#allocation5], 1

</llo_original>
